<compile_context>
chip_gen: v5e
topology: v5e:2x2
jax: 0.10.0
libtpu: 0.0.40
codegen_flags: <defaults>
</compile_context>

<pallas_src>
import jax
import jax.numpy as jnp
from jax.experimental import pallas as pl
from jax.experimental.pallas import tpu as pltpu

RADIUS = 5.0
N_GROUPS = 4


def _round_up(x, m):
    return ((x + m - 1) // m) * m


def _group_of(row):
    # mask_edge_index: group id from the DNA row index mod 11
    m = row % 11
    if m in (0, 10):
        return 0          # phosphate -> conv1
    if m in (1, 9):
        return 1          # sugar     -> conv2
    if 2 <= m <= 5:
        return 2          # major     -> conv3
    return 3              # minor     -> conv4


# --------------------------------------------------------------------------
# Mosaic-safe atan2 (arith + select only), specialised for y >= 0 (y is always
# a cross-product norm here); the divide runs on the EUP via approx reciprocal.
# --------------------------------------------------------------------------
def _atan_poly(t):
    # minimax polynomial for atan(t), |t| <= 1, |err| ~ 1e-5
    t2 = t * t
    return t * (0.9998660 + t2 * (-0.3302995 + t2 * (0.1801410
                + t2 * (-0.0851330 + t2 * 0.0208351))))


def _atan2_nonneg_y(y, x):
    ax = jnp.abs(x)
    big = jnp.maximum(ax, y)
    small = jnp.minimum(ax, y)
    big_safe = jnp.where(big <= 1e-30, 1.0, big)          # also covers (0, 0)
    t = small * pl.reciprocal(big_safe, approx=True)
    a = _atan_poly(t)
    a = jnp.where(y > ax, (jnp.pi / 2) - a, a)
    a = jnp.where(x < 0.0, jnp.pi - a, a)
    return a


# --------------------------------------------------------------------------
# Kernel: grid = (DNA tiles "parallel", protein tiles "arbitrary" reduction).
# Each DNA tile holds rows of exactly one group; weights arrive pre-selected
# by the index_map via the scalar-prefetched tile_group array.
# --------------------------------------------------------------------------
def binet_kernel(tile_group_ref, block_active_ref,
                 x_dna_ref, dna_pos_ref, dna_vec_ref,
                 x_prot_t_ref, prot_pos_t_ref, prot_vec_t_ref, prot_valid_ref,
                 w1pT_ref, w1d_ref, w1f_ref, b1_ref, w2_ref, b2_ref,
                 out_ref, cb_ref, hsum_ref, nedge_ref):
    del tile_group_ref  # consumed by the weight index_maps
    f32 = jnp.float32
    i = pl.program_id(0)
    k = pl.program_id(1)
    n_k = pl.num_programs(1)

    hdim = hsum_ref.shape[1]
    cd = w2_ref.shape[1]

    @pl.when(k == 0)
    def _init():
        hsum_ref[...] = jnp.zeros_like(hsum_ref)
        nedge_ref[...] = jnp.zeros_like(nedge_ref)
        # k-invariant per-DNA-row Linear1 part: x_dna @ w1d_g + b1_g
        cb_ref[...] = (jnp.dot(x_dna_ref[...], w1d_ref[...],
                               preferred_element_type=f32) + b1_ref[...])

    active = block_active_ref[i * n_k + k]

    @pl.when(active != 0)
    def _compute():
        # ---- pairwise geometry, lane-dense [tnd, tnp] planes ----------------
        vd = dna_pos_ref[...]          # [tnd, 3]  dna positions
        nd_ = dna_vec_ref[...]         # [tnd, 3]  dna unit normals
        vpt = prot_pos_t_ref[...]      # [3, tnp]  prot positions (transposed)
        npt = prot_vec_t_ref[...]      # [3, tnp]  prot unit normals (transposed)
        valid = prot_valid_ref[...]    # [1, tnp]  padding / atom_to_mask filter

        vdx, vdy, vdz = vd[:, 0:1], vd[:, 1:2], vd[:, 2:3]
        ndx, ndy, ndz = nd_[:, 0:1], nd_[:, 1:2], nd_[:, 2:3]
        vpx, vpy, vpz = vpt[0:1, :], vpt[1:2, :], vpt[2:3, :]
        npx, npy, npz = npt[0:1, :], npt[1:2, :], npt[2:3, :]

        dx = vpx - vdx                 # d = pos_j(prot) - pos_i(dna)
        dy = vpy - vdy
        dz = vpz - vdz
        d2 = dx * dx + dy * dy + dz * dz
        # radius(v_prot, v_dna, 5) as a dense adjacency mask (squared test so
        # the mask does not wait on the EUP sqrt).
        # TODO(synk): torch_cluster.radius caps neighbours at max_num_neighbors=32;
        # the dense mask keeps all neighbours.
        adj = (d2 < RADIUS * RADIUS).astype(f32) * valid
        dist = jnp.sqrt(d2)

        # angles via the Lagrange identity on unit normals:
        #   ||a x b||^2 = |a|^2 |b|^2 - (a.b)^2
        dot_id = ndx * dx + ndy * dy + ndz * dz            # n_i . d
        dot_jd = npx * dx + npy * dy + npz * dz            # n_j . d
        dot_ij = ndx * npx + ndy * npy + ndz * npz         # n_i . n_j
        ppf2 = _atan2_nonneg_y(jnp.sqrt(jnp.maximum(d2 - dot_id * dot_id, 0.0)), dot_id)
        ppf3 = _atan2_nonneg_y(jnp.sqrt(jnp.maximum(d2 - dot_jd * dot_jd, 0.0)), dot_jd)
        ppf4 = _atan2_nonneg_y(jnp.sqrt(jnp.maximum(1.0 - dot_ij * dot_ij, 0.0)), dot_ij)

        # per-protein-atom Linear1 part: a_T[c, j] = x_prot[j] . w1p_g[:, c]
        a_T = jnp.dot(w1pT_ref[...], x_prot_t_ref[...],
                      preferred_element_type=f32)          # [H, tnp]

        cbv = cb_ref[...]              # [tnd, H]
        w1fv = w1f_ref[...]            # [4, H]

        # ---- hidden channels as lane-dense [tnd, tnp] planes ----------------
        cols = []
        for c in range(hdim):
            hc = a_T[c:c + 1, :] + cbv[:, c:c + 1]
            hc = hc + w1fv[0:1, c:c + 1] * dist
            hc = hc + w1fv[1:2, c:c + 1] * ppf2
            hc = hc + w1fv[2:3, c:c + 1] * ppf3
            hc = hc + w1fv[3:4, c:c + 1] * ppf4
            hc = jnp.maximum(hc, 0.0)                      # ReLU
            cols.append(jnp.sum(hc * adj, axis=1, keepdims=True))   # [tnd, 1]

        hsum_ref[...] = hsum_ref[...] + jnp.concatenate(cols, axis=1)
        nedge_ref[...] = nedge_ref[...] + jnp.sum(adj, axis=1, keepdims=True)

    # ---- finalize on the last protein tile ----------------------------------
    @pl.when(k == n_k - 1)
    def _finalize():
        # Linear2 is applied per edge and then sum-aggregated; it is linear so
        # it commutes with the masked neighbour sum (bias -> n_edges * b2).
        agg = jnp.dot(hsum_ref[...], w2_ref[...],
                      preferred_element_type=f32)          # [tnd, Cd]
        agg = agg + nedge_ref[...] * b2_ref[...]
        out_ref[:, 0:cd] = jnp.maximum(agg, 0.0)           # out  = sum_g relu(agg_g)
        out_ref[:, cd:2 * cd] = agg                        # conv = sum_g agg_g


# --------------------------------------------------------------------------
# Wrapper: group-sort + pad DNA rows, pad protein atoms to a lane multiple,
# per-block activity flags, weight layout with a leading group axis,
# grid/tile selection, un-permute + reshape to (-1, 11, Cd).
# --------------------------------------------------------------------------
def binet_forward(x_dna, v_dna, x_prot, v_prot, prot_vec, dna_vec, params,
                  add_target_features=True, atom_to_mask=None,
                  nd_tile=128, np_tile=512):
    assert add_target_features, "MLP input width requires add_target_features=True"
    n_dna, cd = x_dna.shape
    n_prot, cp = x_prot.shape
    hdim = params["b1"].shape[-1]
    f32 = jnp.float32

    # ---- group-sort DNA rows (one group per tnd-tile) -----------------------
    group_rows = [[], [], [], []]
    for r in range(n_dna):
        group_rows[_group_of(r)].append(r)
    max_group = max(len(g) for g in group_rows)
    # tnd <= nd_tile keeps the per-step working set small (v7x 64 MiB VMEM)
    # and, on v7x, leaves >= 2 Nd tiles so both TensorCores get work.
    tnd = _round_up(min(nd_tile, _round_up(max_group, 8)), 8)

    perm, tile_group = [], []
    for g in range(N_GROUPS):
        rows = group_rows[g]
        if not rows:
            continue
        n_pad = _round_up(len(rows), tnd)
        perm.extend(rows + [-1] * (n_pad - len(rows)))
        tile_group.extend([g] * (n_pad // tnd))
    nd_p = len(perm)
    n_tiles_d = nd_p // tnd

    src = jnp.array([max(r, 0) for r in perm], jnp.int32)          # gather index
    valid_d = jnp.array([1.0 if r >= 0 else 0.0 for r in perm], f32)
    pos_of = [0] * n_dna
    for p_idx, r in enumerate(perm):
        if r >= 0:
            pos_of[r] = p_idx
    pos_of = jnp.array(pos_of, jnp.int32)
    tile_group_arr = jnp.array(tile_group, jnp.int32)

    # unit normals (Lagrange-identity angles need |n| == 1; the PPF angle is
    # scale-invariant so this preserves the reference semantics).
    def _unit(v):
        v = v.astype(f32)
        return v / jnp.maximum(jnp.linalg.norm(v, axis=-1, keepdims=True), 1e-12)

    dna_vec_u = _unit(dna_vec)
    prot_vec_u = _unit(prot_vec)

    x_dna_p = x_dna.astype(f32)[src]
    v_dna_p = v_dna.astype(f32)[src]
    dna_vec_p = dna_vec_u[src]

    # ---- protein padding to a lane multiple, transposed (lane-dense) layout -
    tnp_ = _round_up(min(np_tile, _round_up(n_prot, 128)), 128)
    np_p = _round_up(n_prot, tnp_)
    n_tiles_p = np_p // tnp_

    x_prot_t = jnp.zeros((cp, np_p), f32).at[:, :n_prot].set(x_prot.T.astype(f32))
    v_prot_t = jnp.zeros((3, np_p), f32).at[:, :n_prot].set(v_prot.T.astype(f32))
    prot_vec_t = jnp.zeros((3, np_p), f32).at[:, :n_prot].set(prot_vec_u.T)

    prot_valid = jnp.zeros((1, np_p), f32).at[:, :n_prot].set(1.0)
    if atom_to_mask is not None and not isinstance(atom_to_mask, str):
        # drop edges whose source (protein) atom equals atom_to_mask
        prot_valid = prot_valid.at[0, int(atom_to_mask)].set(0.0)
    # TODO(synk): atom_to_mask as a str triggers np.save of the edge index in
    # the reference module; file I/O is out of scope for the kernel.

    # ---- per-(DNA tile, protein tile) activity via bounding boxes -----------
    BIG = 1e30
    dpos = v_dna_p.reshape(n_tiles_d, tnd, 3)
    dval = valid_d.reshape(n_tiles_d, tnd, 1) > 0
    dmin = jnp.min(jnp.where(dval, dpos, BIG), axis=1)
    dmax = jnp.max(jnp.where(dval, dpos, -BIG), axis=1)

    ppos = jnp.zeros((np_p, 3), f32).at[:n_prot].set(v_prot.astype(f32))
    pval = (jnp.arange(np_p) < n_prot)[:, None]
    ppos_t = ppos.reshape(n_tiles_p, tnp_, 3)
    pval_t = pval.reshape(n_tiles_p, tnp_, 1)
    pmin = jnp.min(jnp.where(pval_t, ppos_t, BIG), axis=1)
    pmax = jnp.max(jnp.where(pval_t, ppos_t, -BIG), axis=1)

    gap = jnp.maximum(0.0, jnp.maximum(pmin[None, :, :] - dmax[:, None, :],
                                       dmin[:, None, :] - pmax[None, :, :]))
    gap2 = jnp.sum(gap * gap, axis=-1)                     # [n_tiles_d, n_tiles_p]
    block_active = (gap2 < RADIUS * RADIUS).astype(jnp.int32).reshape(-1)

    # ---- per-group weights with a leading group axis (picked in index_map) --
    w1pT = jnp.transpose(params["w1p"], (0, 2, 1)).astype(f32)   # [4, H, Cp]
    w1d = params["w1d"].astype(f32)                              # [4, Cd, H]
    w1f = params["w1f"].astype(f32)                              # [4, 4, H]
    b1 = params["b1"].astype(f32)                                # [4, 1, H]
    w2 = params["w2"].astype(f32)                                # [4, H, Cd]
    b2 = params["b2"].astype(f32)                                # [4, 1, Cd]

    grid = (n_tiles_d, n_tiles_p)
    dna_row = lambda i, k, tg, ba: (i, 0)
    prot_col = lambda i, k, tg, ba: (0, k)
    by_group = lambda i, k, tg, ba: (tg[i], 0, 0)

    in_specs = [
        pl.BlockSpec((tnd, cd), dna_row),                  # x_dna (permuted)
        pl.BlockSpec((tnd, 3), dna_row),                   # v_dna (permuted)
        pl.BlockSpec((tnd, 3), dna_row),                   # dna_vec (unit, permuted)
        pl.BlockSpec((cp, tnp_), prot_col),                # x_prot^T
        pl.BlockSpec((3, tnp_), prot_col),                 # v_prot^T
        pl.BlockSpec((3, tnp_), prot_col),                 # prot_vec^T (unit)
        pl.BlockSpec((1, tnp_), prot_col),                 # prot_valid
        pl.BlockSpec((None, hdim, cp), by_group),          # w1p^T  per group
        pl.BlockSpec((None, cd, hdim), by_group),          # w1d    per group
        pl.BlockSpec((None, 4, hdim), by_group),           # w1f    per group
        pl.BlockSpec((None, 1, hdim), by_group),           # b1     per group
        pl.BlockSpec((None, hdim, cd), by_group),          # w2     per group
        pl.BlockSpec((None, 1, cd), by_group),             # b2     per group
    ]
    out_specs = pl.BlockSpec((tnd, 2 * cd), dna_row)       # [relu(agg) | agg]

    packed = pl.pallas_call(
        binet_kernel,
        out_shape=jax.ShapeDtypeStruct((nd_p, 2 * cd), f32),
        grid_spec=pltpu.PrefetchScalarGridSpec(
            num_scalar_prefetch=2,
            grid=grid,
            in_specs=in_specs,
            out_specs=out_specs,
            scratch_shapes=[pltpu.VMEM((tnd, hdim), f32),   # cb: x_dna@w1d + b1
                            pltpu.VMEM((tnd, hdim), f32),   # hsum accumulator
                            pltpu.VMEM((tnd, 1), f32)],     # n_edges accumulator
        ),
        compiler_params=pltpu.CompilerParams(
            dimension_semantics=("parallel", "arbitrary"),
            # 32 MiB scoped VMEM is safe on v5e/v6e/v7x (v7x: 64 MiB physical);
            # v6e/v5e could take np_tile=1024 + a larger limit, but not v7x.
            vmem_limit_bytes=32 * 1024 * 1024,
        ),
    )(tile_group_arr, block_active, x_dna_p, v_dna_p, dna_vec_p,
      x_prot_t, v_prot_t, prot_vec_t, prot_valid,
      w1pT, w1d, w1f, b1, w2, b2)

    rows = packed[pos_of]                  # un-permute to the original row order
    out = rows[:, :cd]
    conv = rows[:, cd:]
    return out.reshape(-1, 11, cd), conv


def init_params(key, prot_channels, dna_channels):
    # 4 PPFConv branches, each MLP([Cp + 4 + Cd, Cd, Cd], batch_norm=False).
    # Linear1 weight is stored split over the concat [x_prot | ppf | x_dna].
    cp, cd = prot_channels, dna_channels
    h = dna_channels
    ks = jax.random.split(key, 6)
    s = 0.2
    return {
        "w1p": s * jax.random.normal(ks[0], (4, cp, h), jnp.float32),
        "w1f": s * jax.random.normal(ks[1], (4, 4, h), jnp.float32),
        "w1d": s * jax.random.normal(ks[2], (4, cd, h), jnp.float32),
        "b1":  s * jax.random.normal(ks[3], (4, 1, h), jnp.float32),
        "w2":  s * jax.random.normal(ks[4], (4, h, cd), jnp.float32),
        "b2":  s * jax.random.normal(ks[5], (4, 1, cd), jnp.float32),
    }


# --------------------------------------------------------------------------
# Pure-JAX reference (dense formulation of the torch module) for checking.
# --------------------------------------------------------------------------
def binet_reference(x_dna, v_dna, x_prot, v_prot, prot_vec, dna_vec, params):
    n_dna, cd = x_dna.shape
    n_prot, cp = x_prot.shape
    d = v_prot[None, :, :] - v_dna[:, None, :]
    dist = jnp.linalg.norm(d, axis=-1)
    adj = (dist < RADIUS).astype(jnp.float32)

    def ang(a, b):
        cr = jnp.cross(a, b)
        return jnp.arctan2(jnp.linalg.norm(cr, axis=-1), jnp.sum(a * b, axis=-1))

    ni = jnp.broadcast_to(dna_vec[:, None, :], (n_dna, n_prot, 3))
    nj = jnp.broadcast_to(prot_vec[None, :, :], (n_dna, n_prot, 3))
    ppf = jnp.stack([dist, ang(ni, d), ang(nj, d), ang(ni, nj)], axis=-1)

    feat = jnp.concatenate([
        jnp.broadcast_to(x_prot[None, :, :], (n_dna, n_prot, cp)),
        ppf,
        jnp.broadcast_to(x_dna[:, None, :], (n_dna, n_prot, cd)),
    ], axis=-1)

    mod = jnp.arange(n_dna) % 11
    gms = [(mod == 0) | (mod == 10), (mod == 1) | (mod == 9),
           (mod >= 2) & (mod <= 5), (mod >= 6) & (mod <= 8)]

    out = jnp.zeros((n_dna, cd), jnp.float32)
    conv = jnp.zeros((n_dna, cd), jnp.float32)
    for g in range(4):
        w1 = jnp.concatenate([params["w1p"][g], params["w1f"][g],
                              params["w1d"][g]], axis=0)
        h = jnp.maximum(feat @ w1 + params["b1"][g], 0.0)
        msg = h @ params["w2"][g] + params["b2"][g]
        wgt = adj * gms[g].astype(jnp.float32)[:, None]
        agg = jnp.sum(msg * wgt[:, :, None], axis=1)
        conv = conv + agg
        out = out + jnp.maximum(agg, 0.0)
    return out.reshape(-1, 11, cd), conv


if __name__ == "__main__":
    key = jax.random.PRNGKey(0)
    k = jax.random.split(key, 8)

    prot_channels, dna_channels = 8, 8
    n_dna, n_prot = 22, 32        # 2 nucleotides * 11 DNA "atoms" each

    x_dna = jax.random.normal(k[0], (n_dna, dna_channels), jnp.float32)
    x_prot = jax.random.normal(k[1], (n_prot, prot_channels), jnp.float32)
    v_dna = 4.0 * jax.random.uniform(k[2], (n_dna, 3), dtype=jnp.float32)
    v_prot = 4.0 * jax.random.uniform(k[3], (n_prot, 3), dtype=jnp.float32)
    dna_vec = jax.random.normal(k[4], (n_dna, 3), jnp.float32)
    dna_vec = dna_vec / jnp.linalg.norm(dna_vec, axis=-1, keepdims=True)
    prot_vec = jax.random.normal(k[5], (n_prot, 3), jnp.float32)
    prot_vec = prot_vec / jnp.linalg.norm(prot_vec, axis=-1, keepdims=True)

    params = init_params(k[6], prot_channels, dna_channels)

    out, conv = binet_forward(x_dna, v_dna, x_prot, v_prot, prot_vec, dna_vec,
                              params, add_target_features=True, atom_to_mask=None)
    jax.block_until_ready((out, conv))

    ref_out, ref_conv = binet_reference(x_dna, v_dna, x_prot, v_prot,
                                        prot_vec, dna_vec, params)
    assert out.shape == (n_dna // 11, 11, dna_channels)
    assert conv.shape == (n_dna, dna_channels)
    assert jnp.allclose(out, ref_out, atol=1e-2, rtol=1e-2), \
        float(jnp.max(jnp.abs(out - ref_out)))
    assert jnp.allclose(conv, ref_conv, atol=1e-2, rtol=1e-2), \
        float(jnp.max(jnp.abs(conv - ref_conv)))
    print("KERNEL_OK")
</pallas_src>

<mosaic_0001>
module attributes {stable_mosaic.version = 11 : i64} {
  func.func @binet_kernel(%arg0: i32, %arg1: i32, %arg2: memref<4xi32, #tpu.memory_space<smem>>, %arg3: memref<4xi32, #tpu.memory_space<smem>>, %arg4: memref<8x8xf32, #tpu.memory_space<vmem>>, %arg5: memref<8x3xf32, #tpu.memory_space<vmem>>, %arg6: memref<8x3xf32, #tpu.memory_space<vmem>>, %arg7: memref<8x128xf32, #tpu.memory_space<vmem>>, %arg8: memref<3x128xf32, #tpu.memory_space<vmem>>, %arg9: memref<3x128xf32, #tpu.memory_space<vmem>>, %arg10: memref<1x128xf32, #tpu.memory_space<vmem>>, %arg11: memref<1x8x8xf32, #tpu.memory_space<vmem>>, %arg12: memref<1x8x8xf32, #tpu.memory_space<vmem>>, %arg13: memref<1x4x8xf32, #tpu.memory_space<vmem>>, %arg14: memref<1x1x8xf32, #tpu.memory_space<vmem>>, %arg15: memref<1x8x8xf32, #tpu.memory_space<vmem>>, %arg16: memref<1x1x8xf32, #tpu.memory_space<vmem>>, %arg17: memref<8x16xf32, #tpu.memory_space<vmem>>, %arg18: memref<8x8xf32, #tpu.memory_space<vmem>>, %arg19: memref<8x8xf32, #tpu.memory_space<vmem>>, %arg20: memref<8x1xf32, #tpu.memory_space<vmem>>) attributes {dimension_semantics = [#tpu.dimension_semantics<parallel>, #tpu.dimension_semantics<arbitrary>], iteration_bounds = array<i64: 4, 1>, scalar_prefetch = 2 : i64, scratch_operands = 3 : i64, tpu.core_type = #tpu.core_type<tc>, window_params = [{transform_indices = @transform_0, window_bounds = array<i64: 8, 8>}, {transform_indices = @transform_1, window_bounds = array<i64: 8, 3>}, {transform_indices = @transform_2, window_bounds = array<i64: 8, 3>}, {transform_indices = @transform_3, window_bounds = array<i64: 8, 128>}, {transform_indices = @transform_4, window_bounds = array<i64: 3, 128>}, {transform_indices = @transform_5, window_bounds = array<i64: 3, 128>}, {transform_indices = @transform_6, window_bounds = array<i64: 1, 128>}, {transform_indices = @transform_7, window_bounds = array<i64: 1, 8, 8>}, {transform_indices = @transform_8, window_bounds = array<i64: 1, 8, 8>}, {transform_indices = @transform_9, window_bounds = array<i64: 1, 4, 8>}, {transform_indices = @transform_10, window_bounds = array<i64: 1, 1, 8>}, {transform_indices = @transform_11, window_bounds = array<i64: 1, 8, 8>}, {transform_indices = @transform_12, window_bounds = array<i64: 1, 1, 8>}, {transform_indices = @transform_13, window_bounds = array<i64: 8, 16>}]} {
    %c0_i32 = arith.constant 0 : i32
    %0 = arith.cmpi eq, %arg1, %c0_i32 : i32
    %1 = arith.extui %0 : i1 to i32
    %c0_i32_0 = arith.constant 0 : i32
    %2 = arith.cmpi ne, %1, %c0_i32_0 : i32
    scf.if %2 {
      %cst = arith.constant 0.000000e+00 : f32
      %13 = vector.broadcast %cst : f32 to vector<8x8xf32>
      %c0 = arith.constant 0 : index
      %c0_5 = arith.constant 0 : index
      %14 = vector.load %arg19[%c0, %c0_5] : memref<8x8xf32, #tpu.memory_space<vmem>>, vector<8x8xf32>
      tpu.vector_store %arg19[%c0, %c0_5], %13 {strides = array<i32>} : memref<8x8xf32, #tpu.memory_space<vmem>>, vector<8x8xf32>,
      %cst_6 = arith.constant 0.000000e+00 : f32
      %15 = vector.broadcast %cst_6 : f32 to vector<8x1xf32>
      %c0_7 = arith.constant 0 : index
      %c0_8 = arith.constant 0 : index
      %16 = vector.load %arg20[%c0_7, %c0_8] : memref<8x1xf32, #tpu.memory_space<vmem>>, vector<8x1xf32>
      tpu.vector_store %arg20[%c0_7, %c0_8], %15 {strides = array<i32>} : memref<8x1xf32, #tpu.memory_space<vmem>>, vector<8x1xf32>,
      %c0_9 = arith.constant 0 : index
      %c0_10 = arith.constant 0 : index
      %17 = vector.load %arg4[%c0_9, %c0_10] : memref<8x8xf32, #tpu.memory_space<vmem>>, vector<8x8xf32>
      %c0_11 = arith.constant 0 : index
      %c0_12 = arith.constant 0 : index
      %c0_13 = arith.constant 0 : index
      %18 = vector.load %arg12[%c0_11, %c0_12, %c0_13] : memref<1x8x8xf32, #tpu.memory_space<vmem>>, vector<1x8x8xf32>
      %19 = vector.shape_cast %18 : vector<1x8x8xf32> to vector<8x8xf32>
      %cst_14 = arith.constant dense<0.000000e+00> : vector<8x8xf32>
      %20 = tpu.matmul %17, %19, %cst_14 {dimension_numbers = #tpu.dot_dimension_numbers<[1], [0], [0], [1], [0, 0, 1, 1], [], []>} : vector<8x8xf32>, vector<8x8xf32>, vector<8x8xf32> -> vector<8x8xf32>
      %c0_15 = arith.constant 0 : index
      %c0_16 = arith.constant 0 : index
      %c0_17 = arith.constant 0 : index
      %21 = vector.load %arg14[%c0_15, %c0_16, %c0_17] : memref<1x1x8xf32, #tpu.memory_space<vmem>>, vector<1x1x8xf32>
      %22 = vector.shape_cast %21 : vector<1x1x8xf32> to vector<1x8xf32>
      %23 = vector.broadcast %22 : vector<1x8xf32> to vector<8x8xf32>
      %24 = arith.addf %20, %23 : vector<8x8xf32>
      %c0_18 = arith.constant 0 : index
      %c0_19 = arith.constant 0 : index
      %25 = vector.load %arg18[%c0_18, %c0_19] : memref<8x8xf32, #tpu.memory_space<vmem>>, vector<8x8xf32>
      tpu.vector_store %arg18[%c0_18, %c0_19], %24 {strides = array<i32>} : memref<8x8xf32, #tpu.memory_space<vmem>>, vector<8x8xf32>,
    } else {
    }
    %c1_i32 = arith.constant 1 : i32
    %3 = arith.muli %arg0, %c1_i32 : i32
    %4 = arith.addi %3, %arg1 : i32
    %5 = arith.index_cast %4 : i32 to index
    %6 = memref.load %arg3[%5] : memref<4xi32, #tpu.memory_space<smem>>
    %c0_i32_1 = arith.constant 0 : i32
    %7 = arith.cmpi ne, %6, %c0_i32_1 : i32
    %8 = arith.extui %7 : i1 to i32
    %c0_i32_2 = arith.constant 0 : i32
    %9 = arith.cmpi ne, %8, %c0_i32_2 : i32
    scf.if %9 {
      %c0 = arith.constant 0 : index
      %c0_5 = arith.constant 0 : index
      %13 = vector.load %arg5[%c0, %c0_5] : memref<8x3xf32, #tpu.memory_space<vmem>>, vector<8x3xf32>
      %c0_6 = arith.constant 0 : index
      %c0_7 = arith.constant 0 : index
      %14 = vector.load %arg6[%c0_6, %c0_7] : memref<8x3xf32, #tpu.memory_space<vmem>>, vector<8x3xf32>
      %c0_8 = arith.constant 0 : index
      %c0_9 = arith.constant 0 : index
      %15 = vector.load %arg8[%c0_8, %c0_9] : memref<3x128xf32, #tpu.memory_space<vmem>>, vector<3x128xf32>
      %c0_10 = arith.constant 0 : index
      %c0_11 = arith.constant 0 : index
      %16 = vector.load %arg9[%c0_10, %c0_11] : memref<3x128xf32, #tpu.memory_space<vmem>>, vector<3x128xf32>
      %c0_12 = arith.constant 0 : index
      %c0_13 = arith.constant 0 : index
      %17 = vector.load %arg10[%c0_12, %c0_13] : memref<1x128xf32, #tpu.memory_space<vmem>>, vector<1x128xf32>
      %18 = vector.extract_strided_slice %13 {offsets = [0, 0], sizes = [8, 1], strides = [1, 1]} : vector<8x3xf32> to vector<8x1xf32>
      %19 = vector.extract_strided_slice %13 {offsets = [0, 1], sizes = [8, 1], strides = [1, 1]} : vector<8x3xf32> to vector<8x1xf32>
      %20 = vector.extract_strided_slice %13 {offsets = [0, 2], sizes = [8, 1], strides = [1, 1]} : vector<8x3xf32> to vector<8x1xf32>
      %21 = vector.extract_strided_slice %14 {offsets = [0, 0], sizes = [8, 1], strides = [1, 1]} : vector<8x3xf32> to vector<8x1xf32>
      %22 = vector.extract_strided_slice %14 {offsets = [0, 1], sizes = [8, 1], strides = [1, 1]} : vector<8x3xf32> to vector<8x1xf32>
      %23 = vector.extract_strided_slice %14 {offsets = [0, 2], sizes = [8, 1], strides = [1, 1]} : vector<8x3xf32> to vector<8x1xf32>
      %24 = vector.extract_strided_slice %15 {offsets = [0, 0], sizes = [1, 128], strides = [1, 1]} : vector<3x128xf32> to vector<1x128xf32>
      %25 = vector.extract_strided_slice %15 {offsets = [1, 0], sizes = [1, 128], strides = [1, 1]} : vector<3x128xf32> to vector<1x128xf32>
      %26 = vector.extract_strided_slice %15 {offsets = [2, 0], sizes = [1, 128], strides = [1, 1]} : vector<3x128xf32> to vector<1x128xf32>
      %27 = vector.extract_strided_slice %16 {offsets = [0, 0], sizes = [1, 128], strides = [1, 1]} : vector<3x128xf32> to vector<1x128xf32>
      %28 = vector.extract_strided_slice %16 {offsets = [1, 0], sizes = [1, 128], strides = [1, 1]} : vector<3x128xf32> to vector<1x128xf32>
      %29 = vector.extract_strided_slice %16 {offsets = [2, 0], sizes = [1, 128], strides = [1, 1]} : vector<3x128xf32> to vector<1x128xf32>
      %30 = vector.broadcast %24 : vector<1x128xf32> to vector<8x128xf32>
      %31 = vector.broadcast %18 : vector<8x1xf32> to vector<8x128xf32>
      %32 = arith.subf %30, %31 : vector<8x128xf32>
      %33 = vector.broadcast %25 : vector<1x128xf32> to vector<8x128xf32>
      %34 = vector.broadcast %19 : vector<8x1xf32> to vector<8x128xf32>
      %35 = arith.subf %33, %34 : vector<8x128xf32>
      %36 = vector.broadcast %26 : vector<1x128xf32> to vector<8x128xf32>
      %37 = vector.broadcast %20 : vector<8x1xf32> to vector<8x128xf32>
      %38 = arith.subf %36, %37 : vector<8x128xf32>
      %39 = arith.mulf %32, %32 : vector<8x128xf32>
      %40 = arith.mulf %35, %35 : vector<8x128xf32>
      %41 = arith.addf %39, %40 : vector<8x128xf32>
      %42 = arith.mulf %38, %38 : vector<8x128xf32>
      %43 = arith.addf %41, %42 : vector<8x128xf32>
      %cst = arith.constant 2.500000e+01 : f32
      %44 = vector.broadcast %cst : f32 to vector<8x128xf32>
      %45 = arith.cmpf olt, %43, %44 : vector<8x128xf32>
      %46 = arith.extui %45 : vector<8x128xi1> to vector<8x128xi32>
      %47 = arith.sitofp %46 : vector<8x128xi32> to vector<8x128xf32>
      %48 = vector.broadcast %17 : vector<1x128xf32> to vector<8x128xf32>
      %49 = arith.mulf %47, %48 : vector<8x128xf32>
      %50 = math.sqrt %43 : vector<8x128xf32>
      %51 = vector.broadcast %21 : vector<8x1xf32> to vector<8x128xf32>
      %52 = arith.mulf %51, %32 : vector<8x128xf32>
      %53 = vector.broadcast %22 : vector<8x1xf32> to vector<8x128xf32>
      %54 = arith.mulf %53, %35 : vector<8x128xf32>
      %55 = arith.addf %52, %54 : vector<8x128xf32>
      %56 = vector.broadcast %23 : vector<8x1xf32> to vector<8x128xf32>
      %57 = arith.mulf %56, %38 : vector<8x128xf32>
      %58 = arith.addf %55, %57 : vector<8x128xf32>
      %59 = vector.broadcast %27 : vector<1x128xf32> to vector<8x128xf32>
      %60 = arith.mulf %59, %32 : vector<8x128xf32>
      %61 = vector.broadcast %28 : vector<1x128xf32> to vector<8x128xf32>
      %62 = arith.mulf %61, %35 : vector<8x128xf32>
      %63 = arith.addf %60, %62 : vector<8x128xf32>
      %64 = vector.broadcast %29 : vector<1x128xf32> to vector<8x128xf32>
      %65 = arith.mulf %64, %38 : vector<8x128xf32>
      %66 = arith.addf %63, %65 : vector<8x128xf32>
      %67 = vector.broadcast %21 : vector<8x1xf32> to vector<8x128xf32>
      %68 = vector.broadcast %27 : vector<1x128xf32> to vector<8x128xf32>
      %69 = arith.mulf %67, %68 : vector<8x128xf32>
      %70 = vector.broadcast %22 : vector<8x1xf32> to vector<8x128xf32>
      %71 = vector.broadcast %28 : vector<1x128xf32> to vector<8x128xf32>
      %72 = arith.mulf %70, %71 : vector<8x128xf32>
      %73 = arith.addf %69, %72 : vector<8x128xf32>
      %74 = vector.broadcast %23 : vector<8x1xf32> to vector<8x128xf32>
      %75 = vector.broadcast %29 : vector<1x128xf32> to vector<8x128xf32>
      %76 = arith.mulf %74, %75 : vector<8x128xf32>
      %77 = arith.addf %73, %76 : vector<8x128xf32>
      %78 = arith.mulf %58, %58 : vector<8x128xf32>
      %79 = arith.subf %43, %78 : vector<8x128xf32>
      %cst_14 = arith.constant 0.000000e+00 : f32
      %80 = vector.broadcast %cst_14 : f32 to vector<8x128xf32>
      %81 = arith.maximumf %79, %80 : vector<8x128xf32>
      %82 = math.sqrt %81 : vector<8x128xf32>
      %83 = math.absf %58 : vector<8x128xf32>
      %84 = arith.maximumf %83, %82 : vector<8x128xf32>
      %85 = arith.minimumf %83, %82 : vector<8x128xf32>
      %cst_15 = arith.constant 1.000000e-30 : f32
      %86 = vector.broadcast %cst_15 : f32 to vector<8x128xf32>
      %87 = arith.cmpf ole, %84, %86 : vector<8x128xf32>
      %cst_16 = arith.constant 1.000000e+00 : f32
      %88 = vector.broadcast %cst_16 : f32 to vector<8x128xf32>
      %89 = arith.select %87, %88, %84 : vector<8x128xi1>, vector<8x128xf32>
      %90 = tpu.reciprocal %89 {approx = true} : vector<8x128xf32> -> vector<8x128xf32>
      %91 = arith.mulf %85, %90 : vector<8x128xf32>
      %92 = arith.mulf %91, %91 : vector<8x128xf32>
      %cst_17 = arith.constant 2.083510e-02 : f32
      %93 = vector.broadcast %cst_17 : f32 to vector<8x128xf32>
      %94 = arith.mulf %92, %93 : vector<8x128xf32>
      %cst_18 = arith.constant -8.513300e-02 : f32
      %95 = vector.broadcast %cst_18 : f32 to vector<8x128xf32>
      %96 = arith.addf %95, %94 : vector<8x128xf32>
      %97 = arith.mulf %92, %96 : vector<8x128xf32>
      %cst_19 = arith.constant 1.801410e-01 : f32
      %98 = vector.broadcast %cst_19 : f32 to vector<8x128xf32>
      %99 = arith.addf %98, %97 : vector<8x128xf32>
      %100 = arith.mulf %92, %99 : vector<8x128xf32>
      %cst_20 = arith.constant -0.330299497 : f32
      %101 = vector.broadcast %cst_20 : f32 to vector<8x128xf32>
      %102 = arith.addf %101, %100 : vector<8x128xf32>
      %103 = arith.mulf %92, %102 : vector<8x128xf32>
      %cst_21 = arith.constant 9.998660e-01 : f32
      %104 = vector.broadcast %cst_21 : f32 to vector<8x128xf32>
      %105 = arith.addf %104, %103 : vector<8x128xf32>
      %106 = arith.mulf %91, %105 : vector<8x128xf32>
      %107 = arith.cmpf ogt, %82, %83 : vector<8x128xf32>
      %cst_22 = arith.constant 1.57079637 : f32
      %108 = vector.broadcast %cst_22 : f32 to vector<8x128xf32>
      %109 = arith.subf %108, %106 : vector<8x128xf32>
      %110 = arith.select %107, %109, %106 : vector<8x128xi1>, vector<8x128xf32>
      %cst_23 = arith.constant 0.000000e+00 : f32
      %111 = vector.broadcast %cst_23 : f32 to vector<8x128xf32>
      %112 = arith.cmpf olt, %58, %111 : vector<8x128xf32>
      %cst_24 = arith.constant 3.14159274 : f32
      %113 = vector.broadcast %cst_24 : f32 to vector<8x128xf32>
      %114 = arith.subf %113, %110 : vector<8x128xf32>
      %115 = arith.select %112, %114, %110 : vector<8x128xi1>, vector<8x128xf32>
      %116 = arith.mulf %66, %66 : vector<8x128xf32>
      %117 = arith.subf %43, %116 : vector<8x128xf32>
      %cst_25 = arith.constant 0.000000e+00 : f32
      %118 = vector.broadcast %cst_25 : f32 to vector<8x128xf32>
      %119 = arith.maximumf %117, %118 : vector<8x128xf32>
      %120 = math.sqrt %119 : vector<8x128xf32>
      %121 = math.absf %66 : vector<8x128xf32>
      %122 = arith.maximumf %121, %120 : vector<8x128xf32>
      %123 = arith.minimumf %121, %120 : vector<8x128xf32>
      %cst_26 = arith.constant 1.000000e-30 : f32
      %124 = vector.broadcast %cst_26 : f32 to vector<8x128xf32>
      %125 = arith.cmpf ole, %122, %124 : vector<8x128xf32>
      %cst_27 = arith.constant 1.000000e+00 : f32
      %126 = vector.broadcast %cst_27 : f32 to vector<8x128xf32>
      %127 = arith.select %125, %126, %122 : vector<8x128xi1>, vector<8x128xf32>
      %128 = tpu.reciprocal %127 {approx = true} : vector<8x128xf32> -> vector<8x128xf32>
      %129 = arith.mulf %123, %128 : vector<8x128xf32>
      %130 = arith.mulf %129, %129 : vector<8x128xf32>
      %cst_28 = arith.constant 2.083510e-02 : f32
      %131 = vector.broadcast %cst_28 : f32 to vector<8x128xf32>
      %132 = arith.mulf %130, %131 : vector<8x128xf32>
      %cst_29 = arith.constant -8.513300e-02 : f32
      %133 = vector.broadcast %cst_29 : f32 to vector<8x128xf32>
      %134 = arith.addf %133, %132 : vector<8x128xf32>
      %135 = arith.mulf %130, %134 : vector<8x128xf32>
      %cst_30 = arith.constant 1.801410e-01 : f32
      %136 = vector.broadcast %cst_30 : f32 to vector<8x128xf32>
      %137 = arith.addf %136, %135 : vector<8x128xf32>
      %138 = arith.mulf %130, %137 : vector<8x128xf32>
      %cst_31 = arith.constant -0.330299497 : f32
      %139 = vector.broadcast %cst_31 : f32 to vector<8x128xf32>
      %140 = arith.addf %139, %138 : vector<8x128xf32>
      %141 = arith.mulf %130, %140 : vector<8x128xf32>
      %cst_32 = arith.constant 9.998660e-01 : f32
      %142 = vector.broadcast %cst_32 : f32 to vector<8x128xf32>
      %143 = arith.addf %142, %141 : vector<8x128xf32>
      %144 = arith.mulf %129, %143 : vector<8x128xf32>
      %145 = arith.cmpf ogt, %120, %121 : vector<8x128xf32>
      %cst_33 = arith.constant 1.57079637 : f32
      %146 = vector.broadcast %cst_33 : f32 to vector<8x128xf32>
      %147 = arith.subf %146, %144 : vector<8x128xf32>
      %148 = arith.select %145, %147, %144 : vector<8x128xi1>, vector<8x128xf32>
      %cst_34 = arith.constant 0.000000e+00 : f32
      %149 = vector.broadcast %cst_34 : f32 to vector<8x128xf32>
      %150 = arith.cmpf olt, %66, %149 : vector<8x128xf32>
      %cst_35 = arith.constant 3.14159274 : f32
      %151 = vector.broadcast %cst_35 : f32 to vector<8x128xf32>
      %152 = arith.subf %151, %148 : vector<8x128xf32>
      %153 = arith.select %150, %152, %148 : vector<8x128xi1>, vector<8x128xf32>
      %154 = arith.mulf %77, %77 : vector<8x128xf32>
      %cst_36 = arith.constant 1.000000e+00 : f32
      %155 = vector.broadcast %cst_36 : f32 to vector<8x128xf32>
      %156 = arith.subf %155, %154 : vector<8x128xf32>
      %cst_37 = arith.constant 0.000000e+00 : f32
      %157 = vector.broadcast %cst_37 : f32 to vector<8x128xf32>
      %158 = arith.maximumf %156, %157 : vector<8x128xf32>
      %159 = math.sqrt %158 : vector<8x128xf32>
      %160 = math.absf %77 : vector<8x128xf32>
      %161 = arith.maximumf %160, %159 : vector<8x128xf32>
      %162 = arith.minimumf %160, %159 : vector<8x128xf32>
      %cst_38 = arith.constant 1.000000e-30 : f32
      %163 = vector.broadcast %cst_38 : f32 to vector<8x128xf32>
      %164 = arith.cmpf ole, %161, %163 : vector<8x128xf32>
      %cst_39 = arith.constant 1.000000e+00 : f32
      %165 = vector.broadcast %cst_39 : f32 to vector<8x128xf32>
      %166 = arith.select %164, %165, %161 : vector<8x128xi1>, vector<8x128xf32>
      %167 = tpu.reciprocal %166 {approx = true} : vector<8x128xf32> -> vector<8x128xf32>
      %168 = arith.mulf %162, %167 : vector<8x128xf32>
      %169 = arith.mulf %168, %168 : vector<8x128xf32>
      %cst_40 = arith.constant 2.083510e-02 : f32
      %170 = vector.broadcast %cst_40 : f32 to vector<8x128xf32>
      %171 = arith.mulf %169, %170 : vector<8x128xf32>
      %cst_41 = arith.constant -8.513300e-02 : f32
      %172 = vector.broadcast %cst_41 : f32 to vector<8x128xf32>
      %173 = arith.addf %172, %171 : vector<8x128xf32>
      %174 = arith.mulf %169, %173 : vector<8x128xf32>
      %cst_42 = arith.constant 1.801410e-01 : f32
      %175 = vector.broadcast %cst_42 : f32 to vector<8x128xf32>
      %176 = arith.addf %175, %174 : vector<8x128xf32>
      %177 = arith.mulf %169, %176 : vector<8x128xf32>
      %cst_43 = arith.constant -0.330299497 : f32
      %178 = vector.broadcast %cst_43 : f32 to vector<8x128xf32>
      %179 = arith.addf %178, %177 : vector<8x128xf32>
      %180 = arith.mulf %169, %179 : vector<8x128xf32>
      %cst_44 = arith.constant 9.998660e-01 : f32
      %181 = vector.broadcast %cst_44 : f32 to vector<8x128xf32>
      %182 = arith.addf %181, %180 : vector<8x128xf32>
      %183 = arith.mulf %168, %182 : vector<8x128xf32>
      %184 = arith.cmpf ogt, %159, %160 : vector<8x128xf32>
      %cst_45 = arith.constant 1.57079637 : f32
      %185 = vector.broadcast %cst_45 : f32 to vector<8x128xf32>
      %186 = arith.subf %185, %183 : vector<8x128xf32>
      %187 = arith.select %184, %186, %183 : vector<8x128xi1>, vector<8x128xf32>
      %cst_46 = arith.constant 0.000000e+00 : f32
      %188 = vector.broadcast %cst_46 : f32 to vector<8x128xf32>
      %189 = arith.cmpf olt, %77, %188 : vector<8x128xf32>
      %cst_47 = arith.constant 3.14159274 : f32
      %190 = vector.broadcast %cst_47 : f32 to vector<8x128xf32>
      %191 = arith.subf %190, %187 : vector<8x128xf32>
      %192 = arith.select %189, %191, %187 : vector<8x128xi1>, vector<8x128xf32>
      %c0_48 = arith.constant 0 : index
      %c0_49 = arith.constant 0 : index
      %c0_50 = arith.constant 0 : index
      %193 = vector.load %arg11[%c0_48, %c0_49, %c0_50] : memref<1x8x8xf32, #tpu.memory_space<vmem>>, vector<1x8x8xf32>
      %194 = vector.shape_cast %193 : vector<1x8x8xf32> to vector<8x8xf32>
      %c0_51 = arith.constant 0 : index
      %c0_52 = arith.constant 0 : index
      %195 = vector.load %arg7[%c0_51, %c0_52] : memref<8x128xf32, #tpu.memory_space<vmem>>, vector<8x128xf32>
      %cst_53 = arith.constant dense<0.000000e+00> : vector<8x128xf32>
      %196 = tpu.matmul %194, %195, %cst_53 {dimension_numbers = #tpu.dot_dimension_numbers<[1], [0], [0], [1], [0, 0, 1, 1], [], []>} : vector<8x8xf32>, vector<8x128xf32>, vector<8x128xf32> -> vector<8x128xf32>
      %c0_54 = arith.constant 0 : index
      %c0_55 = arith.constant 0 : index
      %197 = vector.load %arg18[%c0_54, %c0_55] : memref<8x8xf32, #tpu.memory_space<vmem>>, vector<8x8xf32>
      %c0_56 = arith.constant 0 : index
      %c0_57 = arith.constant 0 : index
      %c0_58 = arith.constant 0 : index
      %198 = vector.load %arg13[%c0_56, %c0_57, %c0_58] : memref<1x4x8xf32, #tpu.memory_space<vmem>>, vector<1x4x8xf32>
      %199 = vector.shape_cast %198 : vector<1x4x8xf32> to vector<4x8xf32>
      %200 = vector.extract_strided_slice %196 {offsets = [0, 0], sizes = [1, 128], strides = [1, 1]} : vector<8x128xf32> to vector<1x128xf32>
      %201 = vector.extract_strided_slice %197 {offsets = [0, 0], sizes = [8, 1], strides = [1, 1]} : vector<8x8xf32> to vector<8x1xf32>
      %202 = vector.broadcast %200 : vector<1x128xf32> to vector<8x128xf32>
      %203 = vector.broadcast %201 : vector<8x1xf32> to vector<8x128xf32>
      %204 = arith.addf %202, %203 : vector<8x128xf32>
      %205 = vector.extract_strided_slice %199 {offsets = [0, 0], sizes = [1, 1], strides = [1, 1]} : vector<4x8xf32> to vector<1x1xf32>
      %206 = vector.broadcast %205 : vector<1x1xf32> to vector<8x128xf32>
      %207 = arith.mulf %206, %50 : vector<8x128xf32>
      %208 = arith.addf %204, %207 : vector<8x128xf32>
      %209 = vector.extract_strided_slice %199 {offsets = [1, 0], sizes = [1, 1], strides = [1, 1]} : vector<4x8xf32> to vector<1x1xf32>
      %210 = vector.broadcast %209 : vector<1x1xf32> to vector<8x128xf32>
      %211 = arith.mulf %210, %115 : vector<8x128xf32>
      %212 = arith.addf %208, %211 : vector<8x128xf32>
      %213 = vector.extract_strided_slice %199 {offsets = [2, 0], sizes = [1, 1], strides = [1, 1]} : vector<4x8xf32> to vector<1x1xf32>
      %214 = vector.broadcast %213 : vector<1x1xf32> to vector<8x128xf32>
      %215 = arith.mulf %214, %153 : vector<8x128xf32>
      %216 = arith.addf %212, %215 : vector<8x128xf32>
      %217 = vector.extract_strided_slice %199 {offsets = [3, 0], sizes = [1, 1], strides = [1, 1]} : vector<4x8xf32> to vector<1x1xf32>
      %218 = vector.broadcast %217 : vector<1x1xf32> to vector<8x128xf32>
      %219 = arith.mulf %218, %192 : vector<8x128xf32>
      %220 = arith.addf %216, %219 : vector<8x128xf32>
      %cst_59 = arith.constant 0.000000e+00 : f32
      %221 = vector.broadcast %cst_59 : f32 to vector<8x128xf32>
      %222 = arith.maximumf %220, %221 : vector<8x128xf32>
      %223 = arith.mulf %222, %49 : vector<8x128xf32>
      %cst_60 = arith.constant dense<0.000000e+00> : vector<8xf32>
      %224 = vector.multi_reduction <add>, %223, %cst_60 [1] : vector<8x128xf32> to vector<8xf32>
      %225 = vector.shape_cast %224 : vector<8xf32> to vector<8x1xf32>
      %226 = vector.extract_strided_slice %196 {offsets = [1, 0], sizes = [1, 128], strides = [1, 1]} : vector<8x128xf32> to vector<1x128xf32>
      %227 = vector.extract_strided_slice %197 {offsets = [0, 1], sizes = [8, 1], strides = [1, 1]} : vector<8x8xf32> to vector<8x1xf32>
      %228 = vector.broadcast %226 : vector<1x128xf32> to vector<8x128xf32>
      %229 = vector.broadcast %227 : vector<8x1xf32> to vector<8x128xf32>
      %230 = arith.addf %228, %229 : vector<8x128xf32>
      %231 = vector.extract_strided_slice %199 {offsets = [0, 1], sizes = [1, 1], strides = [1, 1]} : vector<4x8xf32> to vector<1x1xf32>
      %232 = vector.broadcast %231 : vector<1x1xf32> to vector<8x128xf32>
      %233 = arith.mulf %232, %50 : vector<8x128xf32>
      %234 = arith.addf %230, %233 : vector<8x128xf32>
      %235 = vector.extract_strided_slice %199 {offsets = [1, 1], sizes = [1, 1], strides = [1, 1]} : vector<4x8xf32> to vector<1x1xf32>
      %236 = vector.broadcast %235 : vector<1x1xf32> to vector<8x128xf32>
      %237 = arith.mulf %236, %115 : vector<8x128xf32>
      %238 = arith.addf %234, %237 : vector<8x128xf32>
      %239 = vector.extract_strided_slice %199 {offsets = [2, 1], sizes = [1, 1], strides = [1, 1]} : vector<4x8xf32> to vector<1x1xf32>
      %240 = vector.broadcast %239 : vector<1x1xf32> to vector<8x128xf32>
      %241 = arith.mulf %240, %153 : vector<8x128xf32>
      %242 = arith.addf %238, %241 : vector<8x128xf32>
      %243 = vector.extract_strided_slice %199 {offsets = [3, 1], sizes = [1, 1], strides = [1, 1]} : vector<4x8xf32> to vector<1x1xf32>
      %244 = vector.broadcast %243 : vector<1x1xf32> to vector<8x128xf32>
      %245 = arith.mulf %244, %192 : vector<8x128xf32>
      %246 = arith.addf %242, %245 : vector<8x128xf32>
      %cst_61 = arith.constant 0.000000e+00 : f32
      %247 = vector.broadcast %cst_61 : f32 to vector<8x128xf32>
      %248 = arith.maximumf %246, %247 : vector<8x128xf32>
      %249 = arith.mulf %248, %49 : vector<8x128xf32>
      %cst_62 = arith.constant dense<0.000000e+00> : vector<8xf32>
      %250 = vector.multi_reduction <add>, %249, %cst_62 [1] : vector<8x128xf32> to vector<8xf32>
      %251 = vector.shape_cast %250 : vector<8xf32> to vector<8x1xf32>
      %252 = vector.extract_strided_slice %196 {offsets = [2, 0], sizes = [1, 128], strides = [1, 1]} : vector<8x128xf32> to vector<1x128xf32>
      %253 = vector.extract_strided_slice %197 {offsets = [0, 2], sizes = [8, 1], strides = [1, 1]} : vector<8x8xf32> to vector<8x1xf32>
      %254 = vector.broadcast %252 : vector<1x128xf32> to vector<8x128xf32>
      %255 = vector.broadcast %253 : vector<8x1xf32> to vector<8x128xf32>
      %256 = arith.addf %254, %255 : vector<8x128xf32>
      %257 = vector.extract_strided_slice %199 {offsets = [0, 2], sizes = [1, 1], strides = [1, 1]} : vector<4x8xf32> to vector<1x1xf32>
      %258 = vector.broadcast %257 : vector<1x1xf32> to vector<8x128xf32>
      %259 = arith.mulf %258, %50 : vector<8x128xf32>
      %260 = arith.addf %256, %259 : vector<8x128xf32>
      %261 = vector.extract_strided_slice %199 {offsets = [1, 2], sizes = [1, 1], strides = [1, 1]} : vector<4x8xf32> to vector<1x1xf32>
      %262 = vector.broadcast %261 : vector<1x1xf32> to vector<8x128xf32>
      %263 = arith.mulf %262, %115 : vector<8x128xf32>
      %264 = arith.addf %260, %263 : vector<8x128xf32>
      %265 = vector.extract_strided_slice %199 {offsets = [2, 2], sizes = [1, 1], strides = [1, 1]} : vector<4x8xf32> to vector<1x1xf32>
      %266 = vector.broadcast %265 : vector<1x1xf32> to vector<8x128xf32>
      %267 = arith.mulf %266, %153 : vector<8x128xf32>
      %268 = arith.addf %264, %267 : vector<8x128xf32>
      %269 = vector.extract_strided_slice %199 {offsets = [3, 2], sizes = [1, 1], strides = [1, 1]} : vector<4x8xf32> to vector<1x1xf32>
      %270 = vector.broadcast %269 : vector<1x1xf32> to vector<8x128xf32>
      %271 = arith.mulf %270, %192 : vector<8x128xf32>
      %272 = arith.addf %268, %271 : vector<8x128xf32>
      %cst_63 = arith.constant 0.000000e+00 : f32
      %273 = vector.broadcast %cst_63 : f32 to vector<8x128xf32>
      %274 = arith.maximumf %272, %273 : vector<8x128xf32>
      %275 = arith.mulf %274, %49 : vector<8x128xf32>
      %cst_64 = arith.constant dense<0.000000e+00> : vector<8xf32>
      %276 = vector.multi_reduction <add>, %275, %cst_64 [1] : vector<8x128xf32> to vector<8xf32>
      %277 = vector.shape_cast %276 : vector<8xf32> to vector<8x1xf32>
      %278 = vector.extract_strided_slice %196 {offsets = [3, 0], sizes = [1, 128], strides = [1, 1]} : vector<8x128xf32> to vector<1x128xf32>
      %279 = vector.extract_strided_slice %197 {offsets = [0, 3], sizes = [8, 1], strides = [1, 1]} : vector<8x8xf32> to vector<8x1xf32>
      %280 = vector.broadcast %278 : vector<1x128xf32> to vector<8x128xf32>
      %281 = vector.broadcast %279 : vector<8x1xf32> to vector<8x128xf32>
      %282 = arith.addf %280, %281 : vector<8x128xf32>
      %283 = vector.extract_strided_slice %199 {offsets = [0, 3], sizes = [1, 1], strides = [1, 1]} : vector<4x8xf32> to vector<1x1xf32>
      %284 = vector.broadcast %283 : vector<1x1xf32> to vector<8x128xf32>
      %285 = arith.mulf %284, %50 : vector<8x128xf32>
      %286 = arith.addf %282, %285 : vector<8x128xf32>
      %287 = vector.extract_strided_slice %199 {offsets = [1, 3], sizes = [1, 1], strides = [1, 1]} : vector<4x8xf32> to vector<1x1xf32>
      %288 = vector.broadcast %287 : vector<1x1xf32> to vector<8x128xf32>
      %289 = arith.mulf %288, %115 : vector<8x128xf32>
      %290 = arith.addf %286, %289 : vector<8x128xf32>
      %291 = vector.extract_strided_slice %199 {offsets = [2, 3], sizes = [1, 1], strides = [1, 1]} : vector<4x8xf32> to vector<1x1xf32>
      %292 = vector.broadcast %291 : vector<1x1xf32> to vector<8x128xf32>
      %293 = arith.mulf %292, %153 : vector<8x128xf32>
      %294 = arith.addf %290, %293 : vector<8x128xf32>
      %295 = vector.extract_strided_slice %199 {offsets = [3, 3], sizes = [1, 1], strides = [1, 1]} : vector<4x8xf32> to vector<1x1xf32>
      %296 = vector.broadcast %295 : vector<1x1xf32> to vector<8x128xf32>
      %297 = arith.mulf %296, %192 : vector<8x128xf32>
      %298 = arith.addf %294, %297 : vector<8x128xf32>
      %cst_65 = arith.constant 0.000000e+00 : f32
      %299 = vector.broadcast %cst_65 : f32 to vector<8x128xf32>
      %300 = arith.maximumf %298, %299 : vector<8x128xf32>
      %301 = arith.mulf %300, %49 : vector<8x128xf32>
      %cst_66 = arith.constant dense<0.000000e+00> : vector<8xf32>
      %302 = vector.multi_reduction <add>, %301, %cst_66 [1] : vector<8x128xf32> to vector<8xf32>
      %303 = vector.shape_cast %302 : vector<8xf32> to vector<8x1xf32>
      %304 = vector.extract_strided_slice %196 {offsets = [4, 0], sizes = [1, 128], strides = [1, 1]} : vector<8x128xf32> to vector<1x128xf32>
      %305 = vector.extract_strided_slice %197 {offsets = [0, 4], sizes = [8, 1], strides = [1, 1]} : vector<8x8xf32> to vector<8x1xf32>
      %306 = vector.broadcast %304 : vector<1x128xf32> to vector<8x128xf32>
      %307 = vector.broadcast %305 : vector<8x1xf32> to vector<8x128xf32>
      %308 = arith.addf %306, %307 : vector<8x128xf32>
      %309 = vector.extract_strided_slice %199 {offsets = [0, 4], sizes = [1, 1], strides = [1, 1]} : vector<4x8xf32> to vector<1x1xf32>
      %310 = vector.broadcast %309 : vector<1x1xf32> to vector<8x128xf32>
      %311 = arith.mulf %310, %50 : vector<8x128xf32>
      %312 = arith.addf %308, %311 : vector<8x128xf32>
      %313 = vector.extract_strided_slice %199 {offsets = [1, 4], sizes = [1, 1], strides = [1, 1]} : vector<4x8xf32> to vector<1x1xf32>
      %314 = vector.broadcast %313 : vector<1x1xf32> to vector<8x128xf32>
      %315 = arith.mulf %314, %115 : vector<8x128xf32>
      %316 = arith.addf %312, %315 : vector<8x128xf32>
      %317 = vector.extract_strided_slice %199 {offsets = [2, 4], sizes = [1, 1], strides = [1, 1]} : vector<4x8xf32> to vector<1x1xf32>
      %318 = vector.broadcast %317 : vector<1x1xf32> to vector<8x128xf32>
      %319 = arith.mulf %318, %153 : vector<8x128xf32>
      %320 = arith.addf %316, %319 : vector<8x128xf32>
      %321 = vector.extract_strided_slice %199 {offsets = [3, 4], sizes = [1, 1], strides = [1, 1]} : vector<4x8xf32> to vector<1x1xf32>
      %322 = vector.broadcast %321 : vector<1x1xf32> to vector<8x128xf32>
      %323 = arith.mulf %322, %192 : vector<8x128xf32>
      %324 = arith.addf %320, %323 : vector<8x128xf32>
      %cst_67 = arith.constant 0.000000e+00 : f32
      %325 = vector.broadcast %cst_67 : f32 to vector<8x128xf32>
      %326 = arith.maximumf %324, %325 : vector<8x128xf32>
      %327 = arith.mulf %326, %49 : vector<8x128xf32>
      %cst_68 = arith.constant dense<0.000000e+00> : vector<8xf32>
      %328 = vector.multi_reduction <add>, %327, %cst_68 [1] : vector<8x128xf32> to vector<8xf32>
      %329 = vector.shape_cast %328 : vector<8xf32> to vector<8x1xf32>
      %330 = vector.extract_strided_slice %196 {offsets = [5, 0], sizes = [1, 128], strides = [1, 1]} : vector<8x128xf32> to vector<1x128xf32>
      %331 = vector.extract_strided_slice %197 {offsets = [0, 5], sizes = [8, 1], strides = [1, 1]} : vector<8x8xf32> to vector<8x1xf32>
      %332 = vector.broadcast %330 : vector<1x128xf32> to vector<8x128xf32>
      %333 = vector.broadcast %331 : vector<8x1xf32> to vector<8x128xf32>
      %334 = arith.addf %332, %333 : vector<8x128xf32>
      %335 = vector.extract_strided_slice %199 {offsets = [0, 5], sizes = [1, 1], strides = [1, 1]} : vector<4x8xf32> to vector<1x1xf32>
      %336 = vector.broadcast %335 : vector<1x1xf32> to vector<8x128xf32>
      %337 = arith.mulf %336, %50 : vector<8x128xf32>
      %338 = arith.addf %334, %337 : vector<8x128xf32>
      %339 = vector.extract_strided_slice %199 {offsets = [1, 5], sizes = [1, 1], strides = [1, 1]} : vector<4x8xf32> to vector<1x1xf32>
      %340 = vector.broadcast %339 : vector<1x1xf32> to vector<8x128xf32>
      %341 = arith.mulf %340, %115 : vector<8x128xf32>
      %342 = arith.addf %338, %341 : vector<8x128xf32>
      %343 = vector.extract_strided_slice %199 {offsets = [2, 5], sizes = [1, 1], strides = [1, 1]} : vector<4x8xf32> to vector<1x1xf32>
      %344 = vector.broadcast %343 : vector<1x1xf32> to vector<8x128xf32>
      %345 = arith.mulf %344, %153 : vector<8x128xf32>
      %346 = arith.addf %342, %345 : vector<8x128xf32>
      %347 = vector.extract_strided_slice %199 {offsets = [3, 5], sizes = [1, 1], strides = [1, 1]} : vector<4x8xf32> to vector<1x1xf32>
      %348 = vector.broadcast %347 : vector<1x1xf32> to vector<8x128xf32>
      %349 = arith.mulf %348, %192 : vector<8x128xf32>
      %350 = arith.addf %346, %349 : vector<8x128xf32>
      %cst_69 = arith.constant 0.000000e+00 : f32
      %351 = vector.broadcast %cst_69 : f32 to vector<8x128xf32>
      %352 = arith.maximumf %350, %351 : vector<8x128xf32>
      %353 = arith.mulf %352, %49 : vector<8x128xf32>
      %cst_70 = arith.constant dense<0.000000e+00> : vector<8xf32>
      %354 = vector.multi_reduction <add>, %353, %cst_70 [1] : vector<8x128xf32> to vector<8xf32>
      %355 = vector.shape_cast %354 : vector<8xf32> to vector<8x1xf32>
      %356 = vector.extract_strided_slice %196 {offsets = [6, 0], sizes = [1, 128], strides = [1, 1]} : vector<8x128xf32> to vector<1x128xf32>
      %357 = vector.extract_strided_slice %197 {offsets = [0, 6], sizes = [8, 1], strides = [1, 1]} : vector<8x8xf32> to vector<8x1xf32>
      %358 = vector.broadcast %356 : vector<1x128xf32> to vector<8x128xf32>
      %359 = vector.broadcast %357 : vector<8x1xf32> to vector<8x128xf32>
      %360 = arith.addf %358, %359 : vector<8x128xf32>
      %361 = vector.extract_strided_slice %199 {offsets = [0, 6], sizes = [1, 1], strides = [1, 1]} : vector<4x8xf32> to vector<1x1xf32>
      %362 = vector.broadcast %361 : vector<1x1xf32> to vector<8x128xf32>
      %363 = arith.mulf %362, %50 : vector<8x128xf32>
      %364 = arith.addf %360, %363 : vector<8x128xf32>
      %365 = vector.extract_strided_slice %199 {offsets = [1, 6], sizes = [1, 1], strides = [1, 1]} : vector<4x8xf32> to vector<1x1xf32>
      %366 = vector.broadcast %365 : vector<1x1xf32> to vector<8x128xf32>
      %367 = arith.mulf %366, %115 : vector<8x128xf32>
      %368 = arith.addf %364, %367 : vector<8x128xf32>
      %369 = vector.extract_strided_slice %199 {offsets = [2, 6], sizes = [1, 1], strides = [1, 1]} : vector<4x8xf32> to vector<1x1xf32>
      %370 = vector.broadcast %369 : vector<1x1xf32> to vector<8x128xf32>
      %371 = arith.mulf %370, %153 : vector<8x128xf32>
      %372 = arith.addf %368, %371 : vector<8x128xf32>
      %373 = vector.extract_strided_slice %199 {offsets = [3, 6], sizes = [1, 1], strides = [1, 1]} : vector<4x8xf32> to vector<1x1xf32>
      %374 = vector.broadcast %373 : vector<1x1xf32> to vector<8x128xf32>
      %375 = arith.mulf %374, %192 : vector<8x128xf32>
      %376 = arith.addf %372, %375 : vector<8x128xf32>
      %cst_71 = arith.constant 0.000000e+00 : f32
      %377 = vector.broadcast %cst_71 : f32 to vector<8x128xf32>
      %378 = arith.maximumf %376, %377 : vector<8x128xf32>
      %379 = arith.mulf %378, %49 : vector<8x128xf32>
      %cst_72 = arith.constant dense<0.000000e+00> : vector<8xf32>
      %380 = vector.multi_reduction <add>, %379, %cst_72 [1] : vector<8x128xf32> to vector<8xf32>
      %381 = vector.shape_cast %380 : vector<8xf32> to vector<8x1xf32>
      %382 = vector.extract_strided_slice %196 {offsets = [7, 0], sizes = [1, 128], strides = [1, 1]} : vector<8x128xf32> to vector<1x128xf32>
      %383 = vector.extract_strided_slice %197 {offsets = [0, 7], sizes = [8, 1], strides = [1, 1]} : vector<8x8xf32> to vector<8x1xf32>
      %384 = vector.broadcast %382 : vector<1x128xf32> to vector<8x128xf32>
      %385 = vector.broadcast %383 : vector<8x1xf32> to vector<8x128xf32>
      %386 = arith.addf %384, %385 : vector<8x128xf32>
      %387 = vector.extract_strided_slice %199 {offsets = [0, 7], sizes = [1, 1], strides = [1, 1]} : vector<4x8xf32> to vector<1x1xf32>
      %388 = vector.broadcast %387 : vector<1x1xf32> to vector<8x128xf32>
      %389 = arith.mulf %388, %50 : vector<8x128xf32>
      %390 = arith.addf %386, %389 : vector<8x128xf32>
      %391 = vector.extract_strided_slice %199 {offsets = [1, 7], sizes = [1, 1], strides = [1, 1]} : vector<4x8xf32> to vector<1x1xf32>
      %392 = vector.broadcast %391 : vector<1x1xf32> to vector<8x128xf32>
      %393 = arith.mulf %392, %115 : vector<8x128xf32>
      %394 = arith.addf %390, %393 : vector<8x128xf32>
      %395 = vector.extract_strided_slice %199 {offsets = [2, 7], sizes = [1, 1], strides = [1, 1]} : vector<4x8xf32> to vector<1x1xf32>
      %396 = vector.broadcast %395 : vector<1x1xf32> to vector<8x128xf32>
      %397 = arith.mulf %396, %153 : vector<8x128xf32>
      %398 = arith.addf %394, %397 : vector<8x128xf32>
      %399 = vector.extract_strided_slice %199 {offsets = [3, 7], sizes = [1, 1], strides = [1, 1]} : vector<4x8xf32> to vector<1x1xf32>
      %400 = vector.broadcast %399 : vector<1x1xf32> to vector<8x128xf32>
      %401 = arith.mulf %400, %192 : vector<8x128xf32>
      %402 = arith.addf %398, %401 : vector<8x128xf32>
      %cst_73 = arith.constant 0.000000e+00 : f32
      %403 = vector.broadcast %cst_73 : f32 to vector<8x128xf32>
      %404 = arith.maximumf %402, %403 : vector<8x128xf32>
      %405 = arith.mulf %404, %49 : vector<8x128xf32>
      %cst_74 = arith.constant dense<0.000000e+00> : vector<8xf32>
      %406 = vector.multi_reduction <add>, %405, %cst_74 [1] : vector<8x128xf32> to vector<8xf32>
      %407 = vector.shape_cast %406 : vector<8xf32> to vector<8x1xf32>
      %c0_75 = arith.constant 0 : index
      %c0_76 = arith.constant 0 : index
      %408 = vector.load %arg19[%c0_75, %c0_76] : memref<8x8xf32, #tpu.memory_space<vmem>>, vector<8x8xf32>
      %409 = tpu.concatenate %225, %251, %277, %303, %329, %355, %381, %407 in 1 : vector<8x1xf32>, vector<8x1xf32>, vector<8x1xf32>, vector<8x1xf32>, vector<8x1xf32>, vector<8x1xf32>, vector<8x1xf32>, vector<8x1xf32> -> vector<8x8xf32>
      %410 = arith.addf %408, %409 : vector<8x8xf32>
      %c0_77 = arith.constant 0 : index
      %c0_78 = arith.constant 0 : index
      %411 = vector.load %arg19[%c0_77, %c0_78] : memref<8x8xf32, #tpu.memory_space<vmem>>, vector<8x8xf32>
      tpu.vector_store %arg19[%c0_77, %c0_78], %410 {strides = array<i32>} : memref<8x8xf32, #tpu.memory_space<vmem>>, vector<8x8xf32>,
      %c0_79 = arith.constant 0 : index
      %c0_80 = arith.constant 0 : index
      %412 = vector.load %arg20[%c0_79, %c0_80] : memref<8x1xf32, #tpu.memory_space<vmem>>, vector<8x1xf32>
      %cst_81 = arith.constant dense<0.000000e+00> : vector<8xf32>
      %413 = vector.multi_reduction <add>, %49, %cst_81 [1] : vector<8x128xf32> to vector<8xf32>
      %414 = vector.shape_cast %413 : vector<8xf32> to vector<8x1xf32>
      %415 = arith.addf %412, %414 : vector<8x1xf32>
      %c0_82 = arith.constant 0 : index
      %c0_83 = arith.constant 0 : index
      %416 = vector.load %arg20[%c0_82, %c0_83] : memref<8x1xf32, #tpu.memory_space<vmem>>, vector<8x1xf32>
      tpu.vector_store %arg20[%c0_82, %c0_83], %415 {strides = array<i32>} : memref<8x1xf32, #tpu.memory_space<vmem>>, vector<8x1xf32>,
    } else {
    }
    %c0_i32_3 = arith.constant 0 : i32
    %10 = arith.cmpi eq, %arg1, %c0_i32_3 : i32
    %11 = arith.extui %10 : i1 to i32
    %c0_i32_4 = arith.constant 0 : i32
    %12 = arith.cmpi ne, %11, %c0_i32_4 : i32
    scf.if %12 {
      %c0 = arith.constant 0 : index
      %c0_5 = arith.constant 0 : index
      %13 = vector.load %arg19[%c0, %c0_5] : memref<8x8xf32, #tpu.memory_space<vmem>>, vector<8x8xf32>
      %c0_6 = arith.constant 0 : index
      %c0_7 = arith.constant 0 : index
      %c0_8 = arith.constant 0 : index
      %14 = vector.load %arg15[%c0_6, %c0_7, %c0_8] : memref<1x8x8xf32, #tpu.memory_space<vmem>>, vector<1x8x8xf32>
      %15 = vector.shape_cast %14 : vector<1x8x8xf32> to vector<8x8xf32>
      %cst = arith.constant dense<0.000000e+00> : vector<8x8xf32>
      %16 = tpu.matmul %13, %15, %cst {dimension_numbers = #tpu.dot_dimension_numbers<[1], [0], [0], [1], [0, 0, 1, 1], [], []>} : vector<8x8xf32>, vector<8x8xf32>, vector<8x8xf32> -> vector<8x8xf32>
      %c0_9 = arith.constant 0 : index
      %c0_10 = arith.constant 0 : index
      %17 = vector.load %arg20[%c0_9, %c0_10] : memref<8x1xf32, #tpu.memory_space<vmem>>, vector<8x1xf32>
      %c0_11 = arith.constant 0 : index
      %c0_12 = arith.constant 0 : index
      %c0_13 = arith.constant 0 : index
      %18 = vector.load %arg16[%c0_11, %c0_12, %c0_13] : memref<1x1x8xf32, #tpu.memory_space<vmem>>, vector<1x1x8xf32>
      %19 = vector.shape_cast %18 : vector<1x1x8xf32> to vector<1x8xf32>
      %20 = vector.broadcast %17 : vector<8x1xf32> to vector<8x8xf32>
      %21 = vector.broadcast %19 : vector<1x8xf32> to vector<8x8xf32>
      %22 = arith.mulf %20, %21 : vector<8x8xf32>
      %23 = arith.addf %16, %22 : vector<8x8xf32>
      %cst_14 = arith.constant 0.000000e+00 : f32
      %24 = vector.broadcast %cst_14 : f32 to vector<8x8xf32>
      %25 = arith.maximumf %23, %24 : vector<8x8xf32>
      %c0_15 = arith.constant 0 : index
      %c0_16 = arith.constant 0 : index
      %26 = vector.load %arg17[%c0_15, %c0_16] : memref<8x16xf32, #tpu.memory_space<vmem>>, vector<8x8xf32>
      tpu.vector_store %arg17[%c0_15, %c0_16], %25 {strides = array<i32>} : memref<8x16xf32, #tpu.memory_space<vmem>>, vector<8x8xf32>,
      %c0_17 = arith.constant 0 : index
      %c8 = arith.constant 8 : index
      %27 = vector.load %arg17[%c0_17, %c8] : memref<8x16xf32, #tpu.memory_space<vmem>>, vector<8x8xf32>
      tpu.vector_store %arg17[%c0_17, %c8], %23 {strides = array<i32>} : memref<8x16xf32, #tpu.memory_space<vmem>>, vector<8x8xf32>,
    } else {
    }
    return
  }
  func.func @transform_0(%arg0: i32, %arg1: i32, %arg2: memref<4xi32, #tpu.memory_space<smem>>, %arg3: memref<4xi32, #tpu.memory_space<smem>>) -> (i32, i32) {
    %c0_i32 = arith.constant 0 : i32
    %c0_i32_0 = arith.constant 0 : i32
    return %arg0, %c0_i32 : i32, i32
  }
  func.func @transform_1(%arg0: i32, %arg1: i32, %arg2: memref<4xi32, #tpu.memory_space<smem>>, %arg3: memref<4xi32, #tpu.memory_space<smem>>) -> (i32, i32) {
    %c0_i32 = arith.constant 0 : i32
    %c0_i32_0 = arith.constant 0 : i32
    return %arg0, %c0_i32 : i32, i32
  }
  func.func @transform_2(%arg0: i32, %arg1: i32, %arg2: memref<4xi32, #tpu.memory_space<smem>>, %arg3: memref<4xi32, #tpu.memory_space<smem>>) -> (i32, i32) {
    %c0_i32 = arith.constant 0 : i32
    %c0_i32_0 = arith.constant 0 : i32
    return %arg0, %c0_i32 : i32, i32
  }
  func.func @transform_3(%arg0: i32, %arg1: i32, %arg2: memref<4xi32, #tpu.memory_space<smem>>, %arg3: memref<4xi32, #tpu.memory_space<smem>>) -> (i32, i32) {
    %c0_i32 = arith.constant 0 : i32
    %c0_i32_0 = arith.constant 0 : i32
    return %c0_i32, %arg1 : i32, i32
  }
  func.func @transform_4(%arg0: i32, %arg1: i32, %arg2: memref<4xi32, #tpu.memory_space<smem>>, %arg3: memref<4xi32, #tpu.memory_space<smem>>) -> (i32, i32) {
    %c0_i32 = arith.constant 0 : i32
    %c0_i32_0 = arith.constant 0 : i32
    return %c0_i32, %arg1 : i32, i32
  }
  func.func @transform_5(%arg0: i32, %arg1: i32, %arg2: memref<4xi32, #tpu.memory_space<smem>>, %arg3: memref<4xi32, #tpu.memory_space<smem>>) -> (i32, i32) {
    %c0_i32 = arith.constant 0 : i32
    %c0_i32_0 = arith.constant 0 : i32
    return %c0_i32, %arg1 : i32, i32
  }
  func.func @transform_6(%arg0: i32, %arg1: i32, %arg2: memref<4xi32, #tpu.memory_space<smem>>, %arg3: memref<4xi32, #tpu.memory_space<smem>>) -> (i32, i32) {
    %c0_i32 = arith.constant 0 : i32
    %c0_i32_0 = arith.constant 0 : i32
    return %c0_i32, %arg1 : i32, i32
  }
  func.func @transform_7(%arg0: i32, %arg1: i32, %arg2: memref<4xi32, #tpu.memory_space<smem>>, %arg3: memref<4xi32, #tpu.memory_space<smem>>) -> (i32, i32, i32) {
    %0 = arith.index_cast %arg0 : i32 to index
    %1 = memref.load %arg2[%0] : memref<4xi32, #tpu.memory_space<smem>>
    %c0_i32 = arith.constant 0 : i32
    %c0_i32_0 = arith.constant 0 : i32
    %c0_i32_1 = arith.constant 0 : i32
    return %1, %c0_i32, %c0_i32_0 : i32, i32, i32
  }
  func.func @transform_8(%arg0: i32, %arg1: i32, %arg2: memref<4xi32, #tpu.memory_space<smem>>, %arg3: memref<4xi32, #tpu.memory_space<smem>>) -> (i32, i32, i32) {
    %0 = arith.index_cast %arg0 : i32 to index
    %1 = memref.load %arg2[%0] : memref<4xi32, #tpu.memory_space<smem>>
    %c0_i32 = arith.constant 0 : i32
    %c0_i32_0 = arith.constant 0 : i32
    %c0_i32_1 = arith.constant 0 : i32
    return %1, %c0_i32, %c0_i32_0 : i32, i32, i32
  }
  func.func @transform_9(%arg0: i32, %arg1: i32, %arg2: memref<4xi32, #tpu.memory_space<smem>>, %arg3: memref<4xi32, #tpu.memory_space<smem>>) -> (i32, i32, i32) {
    %0 = arith.index_cast %arg0 : i32 to index
    %1 = memref.load %arg2[%0] : memref<4xi32, #tpu.memory_space<smem>>
    %c0_i32 = arith.constant 0 : i32
    %c0_i32_0 = arith.constant 0 : i32
    %c0_i32_1 = arith.constant 0 : i32
    return %1, %c0_i32, %c0_i32_0 : i32, i32, i32
  }
  func.func @transform_10(%arg0: i32, %arg1: i32, %arg2: memref<4xi32, #tpu.memory_space<smem>>, %arg3: memref<4xi32, #tpu.memory_space<smem>>) -> (i32, i32, i32) {
    %0 = arith.index_cast %arg0 : i32 to index
    %1 = memref.load %arg2[%0] : memref<4xi32, #tpu.memory_space<smem>>
    %c0_i32 = arith.constant 0 : i32
    %c0_i32_0 = arith.constant 0 : i32
    %c0_i32_1 = arith.constant 0 : i32
    return %1, %c0_i32, %c0_i32_0 : i32, i32, i32
  }
  func.func @transform_11(%arg0: i32, %arg1: i32, %arg2: memref<4xi32, #tpu.memory_space<smem>>, %arg3: memref<4xi32, #tpu.memory_space<smem>>) -> (i32, i32, i32) {
    %0 = arith.index_cast %arg0 : i32 to index
    %1 = memref.load %arg2[%0] : memref<4xi32, #tpu.memory_space<smem>>
    %c0_i32 = arith.constant 0 : i32
    %c0_i32_0 = arith.constant 0 : i32
    %c0_i32_1 = arith.constant 0 : i32
    return %1, %c0_i32, %c0_i32_0 : i32, i32, i32
  }
  func.func @transform_12(%arg0: i32, %arg1: i32, %arg2: memref<4xi32, #tpu.memory_space<smem>>, %arg3: memref<4xi32, #tpu.memory_space<smem>>) -> (i32, i32, i32) {
    %0 = arith.index_cast %arg0 : i32 to index
    %1 = memref.load %arg2[%0] : memref<4xi32, #tpu.memory_space<smem>>
    %c0_i32 = arith.constant 0 : i32
    %c0_i32_0 = arith.constant 0 : i32
    %c0_i32_1 = arith.constant 0 : i32
    return %1, %c0_i32, %c0_i32_0 : i32, i32, i32
  }
  func.func @transform_13(%arg0: i32, %arg1: i32, %arg2: memref<4xi32, #tpu.memory_space<smem>>, %arg3: memref<4xi32, #tpu.memory_space<smem>>) -> (i32, i32) {
    %c0_i32 = arith.constant 0 : i32
    %c0_i32_0 = arith.constant 0 : i32
    return %arg0, %c0_i32 : i32, i32
  }
}

</mosaic_0001>

<llo_original>
// kernel: tpu_custom_call.1
$region0: #{tpu_custom_call.1}
  #allocation0 [shape = 'u32[]', space=smem, size = 0x4, offset = 0x4, fixed_abs, tag = 'smem constant byte address 0x4 - core index']
  #allocation1 [shape = 'u32[72,128]{1,0:T(1,128)}', space=vmem, size = 0x9000, scoped, tag = 'internal scratch']
  #allocation2 [shape = 'f32[8,8]{1,0:T(8,128)}', space=vmem, size = 0x1000, scoped, tag = 'scratch operand']
  #allocation3 [shape = 'f32[8,8]{1,0:T(8,128)}', space=vmem, size = 0x1000, scoped, tag = 'scratch operand']
  #allocation4 [shape = 'f32[8,1]{1,0:T(8,128)}', space=vmem, size = 0x1000, scoped, tag = 'scratch operand']
  #allocation5 [shape = 's32[1]{0}', space=sflag, size = 0x4, scoped, tag = 'scoped memory for tpu_custom_call.1']
  #allocation6 [shape = 'u8[512]{0}', space=smem, size = 0x200, scoped, tag = 'prefetched SMEM operand 0']
  #allocation7 [shape = 'u8[512]{0}', space=smem, size = 0x200, scoped, tag = 'prefetched SMEM operand 1']
  %s0 = inlined_call_operand.vmem [shape: s32[4], index: 0, kind: input, shape index: {}]
  %s1 = inlined_call_operand.hbm [shape: s32[4], index: 1, kind: input, shape index: {}]
  %s2 = inlined_call_operand.vmem [shape: f32[32,8], index: 2, kind: input, shape index: {}]
  %s3 = inlined_call_operand.vmem [shape: f32[32,3], index: 3, kind: input, shape index: {}]
  %s4 = inlined_call_operand.vmem [shape: f32[32,3], index: 4, kind: input, shape index: {}]
  %s5 = inlined_call_operand.hbm [shape: f32[8,128], index: 5, kind: input, shape index: {}]
  %s6 = inlined_call_operand.hbm [shape: f32[3,128], index: 6, kind: input, shape index: {}]
  %s7 = inlined_call_operand.hbm [shape: f32[3,128], index: 7, kind: input, shape index: {}]
  %s8 = inlined_call_operand.hbm [shape: f32[1,128], index: 8, kind: input, shape index: {}]
  %s9 = inlined_call_operand.vmem [shape: f32[4,8,8], index: 9, kind: input, shape index: {}]
  %s10 = inlined_call_operand.vmem [shape: f32[4,8,8], index: 10, kind: input, shape index: {}]
  %s11 = inlined_call_operand.vmem [shape: f32[4,4,8], index: 11, kind: input, shape index: {}]
  %s12 = inlined_call_operand.hbm [shape: f32[4,1,8], index: 12, kind: input, shape index: {}]
  %s13 = inlined_call_operand.vmem [shape: f32[4,8,8], index: 13, kind: input, shape index: {}]
  %s14 = inlined_call_operand.vmem [shape: f32[4,1,8], index: 14, kind: input, shape index: {}]
  %s15 = inlined_call_operand.vmem [shape: f32[32,16], index: 15, kind: output, shape index: {}]
  %s16 = sld [smem:[#allocation0]]
  $region117: #{tpu_custom_call.1} parent=0
    _
  %s18 = ssub.s32 1, %s16
  %s19 = scalar_select 0, %s18, %s16
  %s21 = sshll.u32 %s0, 4
  %s22 = int_to_ptr.vmem [resolvable:$true] %s21
  %24 = dma.vmem_to_smem %s22, 16, [#allocation6], [#allocation5]
  %s26 = sshll.u32 %s1, 4
  %s27 = int_to_ptr.hbm [resolvable:$true] %s26
  %29 = dma.hbm_to_smem %s27, 16, [#allocation7], [#allocation5]
  %31 = dma.done [#allocation5], 32
  %32 = sfence
  $region1: #{tpu_custom_call.1} parent=0
    #allocation8 [shape = 'u8[4096]{0}', space=vmem, size = 0x1000, scoped, tag = 'input window, operand 5, single buffered']
    #allocation9 [shape = 's32[2]{0}', space=sflag, size = 0x8, scoped, tag = 'scoped memory for tpu_custom_call.1']
    #allocation10 [shape = 'u8[2048]{0}', space=vmem, size = 0x800, scoped, tag = 'input window, operand 6, single buffered']
    #allocation11 [shape = 's32[1]{0}', space=sflag, size = 0x4, scoped, tag = 'scoped memory for tpu_custom_call.1']
    #allocation12 [shape = 'u8[2048]{0}', space=vmem, size = 0x800, scoped, tag = 'input window, operand 7, single buffered']
    #allocation13 [shape = 'u8[512]{0}', space=vmem, size = 0x400, scoped, tag = 'input window, operand 8, single buffered']
    #allocation14 [shape = 's32[1]{0}', space=sflag, size = 0x4, scoped, tag = 'scoped memory for tpu_custom_call.1']
    #allocation15 [shape = 'u8[1024]{0}', space=vmem, size = 0x400, scoped, tag = 'input window, operand 12']
    %33 = vsyncpa [#allocation9], 0
    %34 = vsyncpa [#allocation11], 0
    %35 = vsyncpa [#allocation14], 0
    loop: start=0, step=1, limit=6
    $region2: #{tpu_custom_call.1} parent=1 // loop_pre_header
      _
    $region3: #{tpu_custom_call.1} parent=1 // loop_header
      %s37 = sphi 0, %s41
      %p38 = scmp.ge.s32.totalorder %s37, 6
      %s44 = sphi 0, %s56
      %s45 = sphi 0, %s52
      %s46 = sphi 0, %s44
      %s47 = sphi 0, %s45
      %s48 = sphi 0, %s46
      %s49 = sphi 0, %s47
      %s59 = sphi 0, %s61
      %s62 = sphi 0, %s59
      %s63 = sphi 0, %s62
      %s79 = sphi 0, %s63
      %s85 = sphi 0, %s87
      %s88 = sphi 0, %s85
      %s89 = sphi 0, %s88
      %s105 = sphi 0, %s89
      %s111 = sphi 0, %s113
      %s114 = sphi 0, %s111
      %s115 = sphi 0, %s114
      %s131 = sphi 0, %s115
      %s137 = sphi 0, %s139
      %s140 = sphi 0, %s137
      %s141 = sphi 0, %s140
      %s157 = sphi 0, %s141
      %s163 = sphi 0, %s165
      %s166 = sphi 0, %s163
      %s167 = sphi 0, %s166
      %s183 = sphi 0, %s167
      %s189 = sphi 0, %s191
      %s192 = sphi 0, %s189
      %s193 = sphi 0, %s192
      %s209 = sphi 0, %s193
      %s215 = sphi 0, %s217
      %s218 = sphi 0, %s215
      %s219 = sphi 0, %s218
      %s235 = sphi 0, %s219
      %s243 = sphi 0, %s245
      %s246 = sphi 0, %s243
      %s247 = sphi 0, %s246
      %s263 = sphi 0, %s247
      %s271 = sphi 0, %s273
      %s274 = sphi 0, %s271
      %s275 = sphi 0, %s274
      %s291 = sphi 0, %s275
      %s299 = sphi 0, %s301
      %s302 = sphi 0, %s299
      %s303 = sphi 0, %s302
      %s319 = sphi 0, %s303
      %s327 = sphi 0, %s329
      %s330 = sphi 0, %s327
      %s331 = sphi 0, %s330
      %s347 = sphi 0, %s331
      %s355 = sphi 0, %s357
      %s358 = sphi 0, %s355
      %s359 = sphi 0, %s358
      %s375 = sphi 0, %s359
      %s383 = sphi 0, %s385
      %s386 = sphi 0, %s383
      %s387 = sphi 0, %s386
      %s403 = sphi 0, %s387
      %s409 = sphi 0, %s411
      %s412 = sphi 0, %s409
      %s413 = sphi 0, %s412
      %s429 = sphi 0, %s413
    $region4: #{tpu_custom_call.1} parent=1 // loop_header_branch
      %40 = sbr.rel (%p38) target = $region8
    $region5: #{tpu_custom_call.1} parent=1 // loop_body
      %s42 = ssub.s32 %s37, 1
      %s43 = ssub.s32 %s37, 2
      %s50 = sadd.s32 1, %s45
      %p51 = scmp.ge.s32.totalorder %s50, 1
      %s52 = scalar_select %p51, 0, %s50
      %s53 = sadd.s32 1, %s44
      %s54 = scalar_select %p51, %s53, %s44
      %p55 = scmp.ge.s32.totalorder %s54, 4
      %s56 = scalar_select %p55, 0, %s54
      %s57 = ssub.s32 %s44, %s56
      %p58 = scmp.eq.s32.totalorder %s57, 0
      %s60 = sadd.s32 %s59, 1
      %s61 = scalar_select %p58, %s59, %s60
      %p64 = pneg %p58
      %p65 = scmp.eq.s32.totalorder %s37, 3
      %p66 = por %p64, %p65
      %p67 = scmp.ne.s32.totalorder %s59, %s62
      %p68 = scmp.eq.s32.totalorder %s37, 0
      %p69 = por %p67, %p68
      %p70 = scmp.ne.s32.totalorder %s59, %s62
      %p71 = scmp.eq.s32.totalorder %s42, 3
      %p72 = por %p70, %p71
      %p73 = scmp.ne.s32.totalorder %s62, %s63
      %p74 = scmp.eq.s32.totalorder %s42, 0
      %p75 = por %p73, %p74
      %p76 = scmp.ne.s32.totalorder %s62, %s63
      %p77 = scmp.eq.s32.totalorder %s43, 3
      %p78 = por %p76, %p77
      %p80 = scmp.ne.s32.totalorder %s63, %s79
      %p81 = scmp.eq.s32.totalorder %s43, 0
      %p82 = por %p80, %p81
      %s83 = ssub.s32 %s44, %s56
      %p84 = scmp.eq.s32.totalorder %s83, 0
      %s86 = sadd.s32 %s85, 1
      %s87 = scalar_select %p84, %s85, %s86
      %p90 = pneg %p84
      %p91 = scmp.eq.s32.totalorder %s37, 3
      %p92 = por %p90, %p91
      %p93 = scmp.ne.s32.totalorder %s85, %s88
      %p94 = scmp.eq.s32.totalorder %s37, 0
      %p95 = por %p93, %p94
      %p96 = scmp.ne.s32.totalorder %s85, %s88
      %p97 = scmp.eq.s32.totalorder %s42, 3
      %p98 = por %p96, %p97
      %p99 = scmp.ne.s32.totalorder %s88, %s89
      %p100 = scmp.eq.s32.totalorder %s42, 0
      %p101 = por %p99, %p100
      %p102 = scmp.ne.s32.totalorder %s88, %s89
      %p103 = scmp.eq.s32.totalorder %s43, 3
      %p104 = por %p102, %p103
      %p106 = scmp.ne.s32.totalorder %s89, %s105
      %p107 = scmp.eq.s32.totalorder %s43, 0
      %p108 = por %p106, %p107
      %s109 = ssub.s32 %s44, %s56
      %p110 = scmp.eq.s32.totalorder %s109, 0
      %s112 = sadd.s32 %s111, 1
      %s113 = scalar_select %p110, %s111, %s112
      %p116 = pneg %p110
      %p117 = scmp.eq.s32.totalorder %s37, 3
      %p118 = por %p116, %p117
      %p119 = scmp.ne.s32.totalorder %s111, %s114
      %p120 = scmp.eq.s32.totalorder %s37, 0
      %p121 = por %p119, %p120
      %p122 = scmp.ne.s32.totalorder %s111, %s114
      %p123 = scmp.eq.s32.totalorder %s42, 3
      %p124 = por %p122, %p123
      %p125 = scmp.ne.s32.totalorder %s114, %s115
      %p126 = scmp.eq.s32.totalorder %s42, 0
      %p127 = por %p125, %p126
      %p128 = scmp.ne.s32.totalorder %s114, %s115
      %p129 = scmp.eq.s32.totalorder %s43, 3
      %p130 = por %p128, %p129
      %p132 = scmp.ne.s32.totalorder %s115, %s131
      %p133 = scmp.eq.s32.totalorder %s43, 0
      %p134 = por %p132, %p133
      %s135 = ssub.s32 %s45, %s52
      %p136 = scmp.eq.s32.totalorder %s135, 0
      %s138 = sadd.s32 %s137, 1
      %s139 = scalar_select %p136, %s137, %s138
      %p142 = pneg %p136
      %p143 = scmp.eq.s32.totalorder %s37, 3
      %p144 = por %p142, %p143
      %p145 = scmp.ne.s32.totalorder %s137, %s140
      %p146 = scmp.eq.s32.totalorder %s37, 0
      %p147 = por %p145, %p146
      %p148 = scmp.ne.s32.totalorder %s137, %s140
      %p149 = scmp.eq.s32.totalorder %s42, 3
      %p150 = por %p148, %p149
      %p151 = scmp.ne.s32.totalorder %s140, %s141
      %p152 = scmp.eq.s32.totalorder %s42, 0
      %p153 = por %p151, %p152
      %p154 = scmp.ne.s32.totalorder %s140, %s141
      %p155 = scmp.eq.s32.totalorder %s43, 3
      %p156 = por %p154, %p155
      %p158 = scmp.ne.s32.totalorder %s141, %s157
      %p159 = scmp.eq.s32.totalorder %s43, 0
      %p160 = por %p158, %p159
      %s161 = ssub.s32 %s45, %s52
      %p162 = scmp.eq.s32.totalorder %s161, 0
      %s164 = sadd.s32 %s163, 1
      %s165 = scalar_select %p162, %s163, %s164
      %p168 = pneg %p162
      %p169 = scmp.eq.s32.totalorder %s37, 3
      %p170 = por %p168, %p169
      %p171 = scmp.ne.s32.totalorder %s163, %s166
      %p172 = scmp.eq.s32.totalorder %s37, 0
      %p173 = por %p171, %p172
      %p174 = scmp.ne.s32.totalorder %s163, %s166
      %p175 = scmp.eq.s32.totalorder %s42, 3
      %p176 = por %p174, %p175
      %p177 = scmp.ne.s32.totalorder %s166, %s167
      %p178 = scmp.eq.s32.totalorder %s42, 0
      %p179 = por %p177, %p178
      %p180 = scmp.ne.s32.totalorder %s166, %s167
      %p181 = scmp.eq.s32.totalorder %s43, 3
      %p182 = por %p180, %p181
      %p184 = scmp.ne.s32.totalorder %s167, %s183
      %p185 = scmp.eq.s32.totalorder %s43, 0
      %p186 = por %p184, %p185
      %s187 = ssub.s32 %s45, %s52
      %p188 = scmp.eq.s32.totalorder %s187, 0
      %s190 = sadd.s32 %s189, 1
      %s191 = scalar_select %p188, %s189, %s190
      %p194 = pneg %p188
      %p195 = scmp.eq.s32.totalorder %s37, 3
      %p196 = por %p194, %p195
      %p197 = scmp.ne.s32.totalorder %s189, %s192
      %p198 = scmp.eq.s32.totalorder %s37, 0
      %p199 = por %p197, %p198
      %p200 = scmp.ne.s32.totalorder %s189, %s192
      %p201 = scmp.eq.s32.totalorder %s42, 3
      %p202 = por %p200, %p201
      %p203 = scmp.ne.s32.totalorder %s192, %s193
      %p204 = scmp.eq.s32.totalorder %s42, 0
      %p205 = por %p203, %p204
      %p206 = scmp.ne.s32.totalorder %s192, %s193
      %p207 = scmp.eq.s32.totalorder %s43, 3
      %p208 = por %p206, %p207
      %p210 = scmp.ne.s32.totalorder %s193, %s209
      %p211 = scmp.eq.s32.totalorder %s43, 0
      %p212 = por %p210, %p211
      %s213 = ssub.s32 %s45, %s52
      %p214 = scmp.eq.s32.totalorder %s213, 0
      %s216 = sadd.s32 %s215, 1
      %s217 = scalar_select %p214, %s215, %s216
      %p220 = pneg %p214
      %p221 = scmp.eq.s32.totalorder %s37, 3
      %p222 = por %p220, %p221
      %p223 = scmp.ne.s32.totalorder %s215, %s218
      %p224 = scmp.eq.s32.totalorder %s37, 0
      %p225 = por %p223, %p224
      %p226 = scmp.ne.s32.totalorder %s215, %s218
      %p227 = scmp.eq.s32.totalorder %s42, 3
      %p228 = por %p226, %p227
      %p229 = scmp.ne.s32.totalorder %s218, %s219
      %p230 = scmp.eq.s32.totalorder %s42, 0
      %p231 = por %p229, %p230
      %p232 = scmp.ne.s32.totalorder %s218, %s219
      %p233 = scmp.eq.s32.totalorder %s43, 3
      %p234 = por %p232, %p233
      %p236 = scmp.ne.s32.totalorder %s219, %s235
      %p237 = scmp.eq.s32.totalorder %s43, 0
      %p238 = por %p236, %p237
      %s239 = sld [smem:[#allocation6 + %s44]]
      %s240 = sld [smem:[#allocation6 + %s56]]
      %s241 = ssub.s32 %s239, %s240
      %p242 = scmp.eq.s32.totalorder %s241, 0
      %s244 = sadd.s32 %s243, 1
      %s245 = scalar_select %p242, %s243, %s244
      %p248 = pneg %p242
      %p249 = scmp.eq.s32.totalorder %s37, 3
      %p250 = por %p248, %p249
      %p251 = scmp.ne.s32.totalorder %s243, %s246
      %p252 = scmp.eq.s32.totalorder %s37, 0
      %p253 = por %p251, %p252
      %p254 = scmp.ne.s32.totalorder %s243, %s246
      %p255 = scmp.eq.s32.totalorder %s42, 3
      %p256 = por %p254, %p255
      %p257 = scmp.ne.s32.totalorder %s246, %s247
      %p258 = scmp.eq.s32.totalorder %s42, 0
      %p259 = por %p257, %p258
      %p260 = scmp.ne.s32.totalorder %s246, %s247
      %p261 = scmp.eq.s32.totalorder %s43, 3
      %p262 = por %p260, %p261
      %p264 = scmp.ne.s32.totalorder %s247, %s263
      %p265 = scmp.eq.s32.totalorder %s43, 0
      %p266 = por %p264, %p265
      %s267 = sld [smem:[#allocation6 + %s44]]
      %s268 = sld [smem:[#allocation6 + %s56]]
      %s269 = ssub.s32 %s267, %s268
      %p270 = scmp.eq.s32.totalorder %s269, 0
      %s272 = sadd.s32 %s271, 1
      %s273 = scalar_select %p270, %s271, %s272
      %p276 = pneg %p270
      %p277 = scmp.eq.s32.totalorder %s37, 3
      %p278 = por %p276, %p277
      %p279 = scmp.ne.s32.totalorder %s271, %s274
      %p280 = scmp.eq.s32.totalorder %s37, 0
      %p281 = por %p279, %p280
      %p282 = scmp.ne.s32.totalorder %s271, %s274
      %p283 = scmp.eq.s32.totalorder %s42, 3
      %p284 = por %p282, %p283
      %p285 = scmp.ne.s32.totalorder %s274, %s275
      %p286 = scmp.eq.s32.totalorder %s42, 0
      %p287 = por %p285, %p286
      %p288 = scmp.ne.s32.totalorder %s274, %s275
      %p289 = scmp.eq.s32.totalorder %s43, 3
      %p290 = por %p288, %p289
      %p292 = scmp.ne.s32.totalorder %s275, %s291
      %p293 = scmp.eq.s32.totalorder %s43, 0
      %p294 = por %p292, %p293
      %s295 = sld [smem:[#allocation6 + %s44]]
      %s296 = sld [smem:[#allocation6 + %s56]]
      %s297 = ssub.s32 %s295, %s296
      %p298 = scmp.eq.s32.totalorder %s297, 0
      %s300 = sadd.s32 %s299, 1
      %s301 = scalar_select %p298, %s299, %s300
      %p304 = pneg %p298
      %p305 = scmp.eq.s32.totalorder %s37, 3
      %p306 = por %p304, %p305
      %p307 = scmp.ne.s32.totalorder %s299, %s302
      %p308 = scmp.eq.s32.totalorder %s37, 0
      %p309 = por %p307, %p308
      %p310 = scmp.ne.s32.totalorder %s299, %s302
      %p311 = scmp.eq.s32.totalorder %s42, 3
      %p312 = por %p310, %p311
      %p313 = scmp.ne.s32.totalorder %s302, %s303
      %p314 = scmp.eq.s32.totalorder %s42, 0
      %p315 = por %p313, %p314
      %p316 = scmp.ne.s32.totalorder %s302, %s303
      %p317 = scmp.eq.s32.totalorder %s43, 3
      %p318 = por %p316, %p317
      %p320 = scmp.ne.s32.totalorder %s303, %s319
      %p321 = scmp.eq.s32.totalorder %s43, 0
      %p322 = por %p320, %p321
      %s323 = sld [smem:[#allocation6 + %s44]]
      %s324 = sld [smem:[#allocation6 + %s56]]
      %s325 = ssub.s32 %s323, %s324
      %p326 = scmp.eq.s32.totalorder %s325, 0
      %s328 = sadd.s32 %s327, 1
      %s329 = scalar_select %p326, %s327, %s328
      %p332 = pneg %p326
      %p333 = scmp.eq.s32.totalorder %s37, 3
      %p334 = por %p332, %p333
      %p335 = scmp.ne.s32.totalorder %s327, %s330
      %p336 = scmp.eq.s32.totalorder %s37, 0
      %p337 = por %p335, %p336
      %p338 = scmp.ne.s32.totalorder %s327, %s330
      %p339 = scmp.eq.s32.totalorder %s42, 3
      %p340 = por %p338, %p339
      %p341 = scmp.ne.s32.totalorder %s330, %s331
      %p342 = scmp.eq.s32.totalorder %s42, 0
      %p343 = por %p341, %p342
      %p344 = scmp.ne.s32.totalorder %s330, %s331
      %p345 = scmp.eq.s32.totalorder %s43, 3
      %p346 = por %p344, %p345
      %p348 = scmp.ne.s32.totalorder %s331, %s347
      %p349 = scmp.eq.s32.totalorder %s43, 0
      %p350 = por %p348, %p349
      %s351 = sld [smem:[#allocation6 + %s44]]
      %s352 = sld [smem:[#allocation6 + %s56]]
      %s353 = ssub.s32 %s351, %s352
      %p354 = scmp.eq.s32.totalorder %s353, 0
      %s356 = sadd.s32 %s355, 1
      %s357 = scalar_select %p354, %s355, %s356
      %p360 = pneg %p354
      %p361 = scmp.eq.s32.totalorder %s37, 3
      %p362 = por %p360, %p361
      %p363 = scmp.ne.s32.totalorder %s355, %s358
      %p364 = scmp.eq.s32.totalorder %s37, 0
      %p365 = por %p363, %p364
      %p366 = scmp.ne.s32.totalorder %s355, %s358
      %p367 = scmp.eq.s32.totalorder %s42, 3
      %p368 = por %p366, %p367
      %p369 = scmp.ne.s32.totalorder %s358, %s359
      %p370 = scmp.eq.s32.totalorder %s42, 0
      %p371 = por %p369, %p370
      %p372 = scmp.ne.s32.totalorder %s358, %s359
      %p373 = scmp.eq.s32.totalorder %s43, 3
      %p374 = por %p372, %p373
      %p376 = scmp.ne.s32.totalorder %s359, %s375
      %p377 = scmp.eq.s32.totalorder %s43, 0
      %p378 = por %p376, %p377
      %s379 = sld [smem:[#allocation6 + %s44]]
      %s380 = sld [smem:[#allocation6 + %s56]]
      %s381 = ssub.s32 %s379, %s380
      %p382 = scmp.eq.s32.totalorder %s381, 0
      %s384 = sadd.s32 %s383, 1
      %s385 = scalar_select %p382, %s383, %s384
      %p388 = pneg %p382
      %p389 = scmp.eq.s32.totalorder %s37, 3
      %p390 = por %p388, %p389
      %p391 = scmp.ne.s32.totalorder %s383, %s386
      %p392 = scmp.eq.s32.totalorder %s37, 0
      %p393 = por %p391, %p392
      %p394 = scmp.ne.s32.totalorder %s383, %s386
      %p395 = scmp.eq.s32.totalorder %s42, 3
      %p396 = por %p394, %p395
      %p397 = scmp.ne.s32.totalorder %s386, %s387
      %p398 = scmp.eq.s32.totalorder %s42, 0
      %p399 = por %p397, %p398
      %p400 = scmp.ne.s32.totalorder %s386, %s387
      %p401 = scmp.eq.s32.totalorder %s43, 3
      %p402 = por %p400, %p401
      %p404 = scmp.ne.s32.totalorder %s387, %s403
      %p405 = scmp.eq.s32.totalorder %s43, 0
      %p406 = por %p404, %p405
      %s407 = ssub.s32 %s44, %s56
      %p408 = scmp.eq.s32.totalorder %s407, 0
      %s410 = sadd.s32 %s409, 1
      %s411 = scalar_select %p408, %s409, %s410
      %p414 = pneg %p408
      %p415 = scmp.eq.s32.totalorder %s37, 3
      %p416 = por %p414, %p415
      %p417 = scmp.ne.s32.totalorder %s409, %s412
      %p418 = scmp.eq.s32.totalorder %s37, 0
      %p419 = por %p417, %p418
      %p420 = scmp.ne.s32.totalorder %s409, %s412
      %p421 = scmp.eq.s32.totalorder %s42, 3
      %p422 = por %p420, %p421
      %p423 = scmp.ne.s32.totalorder %s412, %s413
      %p424 = scmp.eq.s32.totalorder %s42, 0
      %p425 = por %p423, %p424
      %p426 = scmp.ne.s32.totalorder %s412, %s413
      %p427 = scmp.eq.s32.totalorder %s43, 3
      %p428 = por %p426, %p427
      %p430 = scmp.ne.s32.totalorder %s413, %s429
      %p431 = scmp.eq.s32.totalorder %s43, 0
      %p432 = por %p430, %p431
      %p433 = scmp.le.s32.totalorder 1, %s37
      %p434 = scmp.lt.s32.totalorder %s37, 5
      %p435 = pnand %p433, %p434
      %p436 = pneg %p435
      // Predicated region
      $region9: #{tpu_custom_call.1} parent=5 // pred_check
        _
      $region10: #{tpu_custom_call.1} parent=5 // pred_check_branch
        %438 = sbr.rel (%p435) target = $region12
      $region11: #{tpu_custom_call.1} parent=5 // pred_region
        %s439 = ssub.s32 %s37, 1
        // Predicated region
        $region13: #{tpu_custom_call.1} parent=11 // pred_check
          %p440 = pneg %p153
        $region14: #{tpu_custom_call.1} parent=11 // pred_check_branch
          %442 = sbr.rel (%p440) target = $region16
        $region15: #{tpu_custom_call.1} parent=11 // pred_region
          %444 = vsyncadd [#allocation9], 0
          %s445 = smul.addr %s47, 8
          %s446 = scalar_lea.hbm %s5, %s445
          %s448 = sshll.u32 %s446, 4
          %s449 = int_to_ptr.hbm [resolvable:$true] %s448
          %s450 = sshll.u32 [#allocation8], 4
          %s451 = int_to_ptr.vmem [resolvable:$true] %s450
          %453 = dma.hbm_to_vmem [thread:$0]  %s449, 128, %s451, [#allocation9]
        $region16: #{tpu_custom_call.1} parent=11 // pred_fallthru
          _
        // Predicated region
        $region17: #{tpu_custom_call.1} parent=11 // pred_check
          %p454 = pneg %p179
        $region18: #{tpu_custom_call.1} parent=11 // pred_check_branch
          %456 = sbr.rel (%p454) target = $region20
        $region19: #{tpu_custom_call.1} parent=11 // pred_region
          %458 = vsyncadd [#allocation11], 0
          %s459 = smul.addr %s47, 4
          %s460 = scalar_lea.hbm %s6, %s459
          %s462 = sshll.u32 %s460, 4
          %s463 = int_to_ptr.hbm [resolvable:$true] %s462
          %s464 = sshll.u32 [#allocation10], 4
          %s465 = int_to_ptr.vmem [resolvable:$true] %s464
          %467 = dma.hbm_to_vmem [thread:$0]  %s463, 64, %s465, [#allocation11]
        $region20: #{tpu_custom_call.1} parent=11 // pred_fallthru
          _
        // Predicated region
        $region21: #{tpu_custom_call.1} parent=11 // pred_check
          %p468 = pneg %p205
        $region22: #{tpu_custom_call.1} parent=11 // pred_check_branch
          %470 = sbr.rel (%p468) target = $region24
        $region23: #{tpu_custom_call.1} parent=11 // pred_region
          %472 = vsyncadd [#allocation11], 0
          %s473 = smul.addr %s47, 4
          %s474 = scalar_lea.hbm %s7, %s473
          %s476 = sshll.u32 %s474, 4
          %s477 = int_to_ptr.hbm [resolvable:$true] %s476
          %s478 = sshll.u32 [#allocation12], 4
          %s479 = int_to_ptr.vmem [resolvable:$true] %s478
          %481 = dma.hbm_to_vmem [thread:$0]  %s477, 64, %s479, [#allocation11]
        $region24: #{tpu_custom_call.1} parent=11 // pred_fallthru
          _
        // Predicated region
        $region25: #{tpu_custom_call.1} parent=11 // pred_check
          %p482 = pneg %p231
        $region26: #{tpu_custom_call.1} parent=11 // pred_check_branch
          %484 = sbr.rel (%p482) target = $region28
        $region27: #{tpu_custom_call.1} parent=11 // pred_region
          %486 = vsyncadd [#allocation14], 0
          %s487 = scalar_lea.hbm %s8, %s47
          %s489 = sshll.u32 %s487, 4
          %s490 = int_to_ptr.hbm [resolvable:$true] %s489
          %s491 = sshll.u32 [#allocation13], 4
          %s492 = int_to_ptr.vmem [resolvable:$true] %s491
          %494 = dma.hbm_to_vmem [thread:$0]  %s490, 16, %s492, [#allocation14]
        $region28: #{tpu_custom_call.1} parent=11 // pred_fallthru
          _
      $region12: #{tpu_custom_call.1} parent=5 // pred_fallthru
        _
      %p495 = scmp.lt.s32.totalorder %s37, 4
      // Predicated region
      $region29: #{tpu_custom_call.1} parent=5 // pred_check
        %p496 = pneg %p495
      $region30: #{tpu_custom_call.1} parent=5 // pred_check_branch
        %498 = sbr.rel (%p496) target = $region32
      $region31: #{tpu_custom_call.1} parent=5 // pred_region
        // Predicated region
        $region33: #{tpu_custom_call.1} parent=31 // pred_check
          %p499 = pneg %p69
        $region34: #{tpu_custom_call.1} parent=31 // pred_check_branch
          %501 = sbr.rel (%p499) target = $region36
        $region35: #{tpu_custom_call.1} parent=31 // pred_region
          %p502 = scmp.lt.s32.totalorder %s44, 3
          %s503 = scalar_select %p502, %s44, 3
          %s504 = smul.addr %s503, 8
          %s505 = scalar_lea.vmem %s2, %s504
        $region36: #{tpu_custom_call.1} parent=31 // pred_fallthru
          _
        // Predicated region
        $region37: #{tpu_custom_call.1} parent=31 // pred_check
          %p506 = pneg %p95
        $region38: #{tpu_custom_call.1} parent=31 // pred_check_branch
          %508 = sbr.rel (%p506) target = $region40
        $region39: #{tpu_custom_call.1} parent=31 // pred_region
          %p509 = scmp.lt.s32.totalorder %s44, 3
          %s510 = scalar_select %p509, %s44, 3
          %s511 = smul.addr %s510, 8
          %s512 = scalar_lea.vmem %s3, %s511
        $region40: #{tpu_custom_call.1} parent=31 // pred_fallthru
          _
        // Predicated region
        $region41: #{tpu_custom_call.1} parent=31 // pred_check
          %p513 = pneg %p121
        $region42: #{tpu_custom_call.1} parent=31 // pred_check_branch
          %515 = sbr.rel (%p513) target = $region44
        $region43: #{tpu_custom_call.1} parent=31 // pred_region
          %p516 = scmp.lt.s32.totalorder %s44, 3
          %s517 = scalar_select %p516, %s44, 3
          %s518 = smul.addr %s517, 8
          %s519 = scalar_lea.vmem %s4, %s518
        $region44: #{tpu_custom_call.1} parent=31 // pred_fallthru
          _
        // Predicated region
        $region45: #{tpu_custom_call.1} parent=31 // pred_check
          %p520 = pneg %p253
        $region46: #{tpu_custom_call.1} parent=31 // pred_check_branch
          %522 = sbr.rel (%p520) target = $region48
        $region47: #{tpu_custom_call.1} parent=31 // pred_region
          %s523 = sld [smem:[#allocation6 + %s44]]
          %p524 = scmp.lt.s32.totalorder %s523, 3
          %s525 = scalar_select %p524, %s523, 3
          %s526 = smul.addr %s525, 8
          %s527 = scalar_lea.vmem %s9, %s526
          %s528 = sld [smem:[#allocation6 + %s44]]
        $region48: #{tpu_custom_call.1} parent=31 // pred_fallthru
          _
        // Predicated region
        $region49: #{tpu_custom_call.1} parent=31 // pred_check
          %p529 = pneg %p281
        $region50: #{tpu_custom_call.1} parent=31 // pred_check_branch
          %531 = sbr.rel (%p529) target = $region52
        $region51: #{tpu_custom_call.1} parent=31 // pred_region
          %s532 = sld [smem:[#allocation6 + %s44]]
          %p533 = scmp.lt.s32.totalorder %s532, 3
          %s534 = scalar_select %p533, %s532, 3
          %s535 = smul.addr %s534, 8
          %s536 = scalar_lea.vmem %s10, %s535
          %s537 = sld [smem:[#allocation6 + %s44]]
        $region52: #{tpu_custom_call.1} parent=31 // pred_fallthru
          _
        // Predicated region
        $region53: #{tpu_custom_call.1} parent=31 // pred_check
          %p538 = pneg %p309
        $region54: #{tpu_custom_call.1} parent=31 // pred_check_branch
          %540 = sbr.rel (%p538) target = $region56
        $region55: #{tpu_custom_call.1} parent=31 // pred_region
          %s541 = sld [smem:[#allocation6 + %s44]]
          %p542 = scmp.lt.s32.totalorder %s541, 3
          %s543 = scalar_select %p542, %s541, 3
          %s544 = smul.addr %s543, 4
          %s545 = scalar_lea.vmem %s11, %s544
          %s546 = sld [smem:[#allocation6 + %s44]]
        $region56: #{tpu_custom_call.1} parent=31 // pred_fallthru
          _
        // Predicated region
        $region57: #{tpu_custom_call.1} parent=31 // pred_check
          %p547 = pneg %p337
        $region58: #{tpu_custom_call.1} parent=31 // pred_check_branch
          %549 = sbr.rel (%p547) target = $region60
        $region59: #{tpu_custom_call.1} parent=31 // pred_region
          %s550 = sand.u32 %s37, 1
          %s551 = scalar_lea.sflag [#allocation9], %s550
          %s552 = sand.u32 %s327, 1
          %s553 = scalar_lea.vmem [#allocation15], %s552
          %s554 = sld [smem:[#allocation6 + %s44]]
          %556 = vsyncadd %s551, 0
          %s557 = scalar_lea.hbm %s12, %s554
          %s559 = sshll.u32 %s557, 4
          %s560 = int_to_ptr.hbm [resolvable:$true] %s559
          %s561 = sshll.u32 %s553, 4
          %s562 = int_to_ptr.vmem [resolvable:$true] %s561
          %564 = dma.hbm_to_vmem [thread:$0]  %s560, 16, %s562, %s551
        $region60: #{tpu_custom_call.1} parent=31 // pred_fallthru
          _
        // Predicated region
        $region61: #{tpu_custom_call.1} parent=31 // pred_check
          %p565 = pneg %p365
        $region62: #{tpu_custom_call.1} parent=31 // pred_check_branch
          %567 = sbr.rel (%p565) target = $region64
        $region63: #{tpu_custom_call.1} parent=31 // pred_region
          %s568 = sld [smem:[#allocation6 + %s44]]
          %p569 = scmp.lt.s32.totalorder %s568, 3
          %s570 = scalar_select %p569, %s568, 3
          %s571 = smul.addr %s570, 8
          %s572 = scalar_lea.vmem %s13, %s571
          %s573 = sld [smem:[#allocation6 + %s44]]
        $region64: #{tpu_custom_call.1} parent=31 // pred_fallthru
          _
        // Predicated region
        $region65: #{tpu_custom_call.1} parent=31 // pred_check
          %p574 = pneg %p393
        $region66: #{tpu_custom_call.1} parent=31 // pred_check_branch
          %576 = sbr.rel (%p574) target = $region68
        $region67: #{tpu_custom_call.1} parent=31 // pred_region
          %s577 = sld [smem:[#allocation6 + %s44]]
          %p578 = scmp.lt.s32.totalorder %s577, 3
          %s579 = scalar_select %p578, %s577, 3
          %s580 = scalar_lea.vmem %s14, %s579
          %s581 = sld [smem:[#allocation6 + %s44]]
        $region68: #{tpu_custom_call.1} parent=31 // pred_fallthru
          _
      $region32: #{tpu_custom_call.1} parent=5 // pred_fallthru
        _
      %p582 = scmp.le.s32.totalorder 1, %s37
      %p583 = scmp.lt.s32.totalorder %s37, 5
      %p584 = pnand %p582, %p583
      %p585 = pneg %p584
      // Predicated region
      $region69: #{tpu_custom_call.1} parent=5 // pred_check
        _
      $region70: #{tpu_custom_call.1} parent=5 // pred_check_branch
        %587 = sbr.rel (%p584) target = $region72
      $region71: #{tpu_custom_call.1} parent=5 // pred_region
        %s588 = ssub.s32 %s37, 1
        // Predicated region
        $region73: #{tpu_custom_call.1} parent=71 // pred_check
          %p589 = pneg %p153
        $region74: #{tpu_custom_call.1} parent=71 // pred_check_branch
          %591 = sbr.rel (%p589) target = $region76
        $region75: #{tpu_custom_call.1} parent=71 // pred_region
          %593 = dma.done [#allocation9], 128
        $region76: #{tpu_custom_call.1} parent=71 // pred_fallthru
          _
        // Predicated region
        $region77: #{tpu_custom_call.1} parent=71 // pred_check
          %p594 = pneg %p179
        $region78: #{tpu_custom_call.1} parent=71 // pred_check_branch
          %596 = sbr.rel (%p594) target = $region80
        $region79: #{tpu_custom_call.1} parent=71 // pred_region
          %598 = dma.done [#allocation11], 64
        $region80: #{tpu_custom_call.1} parent=71 // pred_fallthru
          _
        // Predicated region
        $region81: #{tpu_custom_call.1} parent=71 // pred_check
          %p599 = pneg %p205
        $region82: #{tpu_custom_call.1} parent=71 // pred_check_branch
          %601 = sbr.rel (%p599) target = $region84
        $region83: #{tpu_custom_call.1} parent=71 // pred_region
          %603 = dma.done [#allocation11], 64
        $region84: #{tpu_custom_call.1} parent=71 // pred_fallthru
          _
        // Predicated region
        $region85: #{tpu_custom_call.1} parent=71 // pred_check
          %p604 = pneg %p231
        $region86: #{tpu_custom_call.1} parent=71 // pred_check_branch
          %606 = sbr.rel (%p604) target = $region88
        $region87: #{tpu_custom_call.1} parent=71 // pred_region
          %608 = dma.done [#allocation14], 16
        $region88: #{tpu_custom_call.1} parent=71 // pred_fallthru
          _
        %s609 = sand.u32 %s42, 1
        %s610 = scalar_lea.sflag [#allocation9], %s609
        %s611 = sand.u32 %s330, 1
        %s612 = scalar_lea.vmem [#allocation15], %s611
        // Predicated region
        $region89: #{tpu_custom_call.1} parent=71 // pred_check
          %p613 = pneg %p343
        $region90: #{tpu_custom_call.1} parent=71 // pred_check_branch
          %615 = sbr.rel (%p613) target = $region92
        $region91: #{tpu_custom_call.1} parent=71 // pred_region
          %617 = dma.done %s610, 16
        $region92: #{tpu_custom_call.1} parent=71 // pred_fallthru
          _
        %p618 = scmp.lt.s32.totalorder %s46, 3
        %s619 = scalar_select %p618, %s46, 3
        %s620 = smul.addr %s619, 8
        %s621 = scalar_lea.vmem %s2, %s620
        %p622 = pneg %p75
        %p623 = pneg %p72
        %p624 = scmp.lt.s32.totalorder %s46, 3
        %s625 = scalar_select %p624, %s46, 3
        %s626 = smul.addr %s625, 8
        %s627 = scalar_lea.vmem %s3, %s626
        %p628 = pneg %p101
        %p629 = pneg %p98
        %p630 = scmp.lt.s32.totalorder %s46, 3
        %s631 = scalar_select %p630, %s46, 3
        %s632 = smul.addr %s631, 8
        %s633 = scalar_lea.vmem %s4, %s632
        %p634 = pneg %p127
        %p635 = pneg %p124
        %p636 = pneg %p153
        %p637 = pneg %p150
        %p638 = pneg %p179
        %p639 = pneg %p176
        %p640 = pneg %p205
        %p641 = pneg %p202
        %p642 = pneg %p231
        %p643 = pneg %p228
        %s644 = sld [smem:[#allocation6 + %s46]]
        %p645 = scmp.lt.s32.totalorder %s644, 3
        %s646 = scalar_select %p645, %s644, 3
        %s647 = smul.addr %s646, 8
        %s648 = scalar_lea.vmem %s9, %s647
        %p649 = pneg %p259
        %p650 = pneg %p256
        %s651 = sld [smem:[#allocation6 + %s46]]
        %p652 = scmp.lt.s32.totalorder %s651, 3
        %s653 = scalar_select %p652, %s651, 3
        %s654 = smul.addr %s653, 8
        %s655 = scalar_lea.vmem %s10, %s654
        %p656 = pneg %p287
        %p657 = pneg %p284
        %s658 = sld [smem:[#allocation6 + %s46]]
        %p659 = scmp.lt.s32.totalorder %s658, 3
        %s660 = scalar_select %p659, %s658, 3
        %s661 = smul.addr %s660, 4
        %s662 = scalar_lea.vmem %s11, %s661
        %p663 = pneg %p315
        %p664 = pneg %p312
        %s665 = sand.u32 %s42, 1
        %s666 = scalar_lea.sflag [#allocation9], %s665
        %s667 = sand.u32 %s330, 1
        %s668 = scalar_lea.vmem [#allocation15], %s667
        %p669 = pneg %p343
        %p670 = pneg %p340
        %s671 = sld [smem:[#allocation6 + %s46]]
        %p672 = scmp.lt.s32.totalorder %s671, 3
        %s673 = scalar_select %p672, %s671, 3
        %s674 = smul.addr %s673, 8
        %s675 = scalar_lea.vmem %s13, %s674
        %p676 = pneg %p371
        %p677 = pneg %p368
        %s678 = sld [smem:[#allocation6 + %s46]]
        %p679 = scmp.lt.s32.totalorder %s678, 3
        %s680 = scalar_select %p679, %s678, 3
        %s681 = scalar_lea.vmem %s14, %s680
        %p682 = pneg %p399
        %p683 = pneg %p396
        %p684 = pneg %p425
        %p685 = pneg %p422
        %p686 = scmp.lt.s32.totalorder %s46, 3
        %s687 = scalar_select %p686, %s46, 3
        %s688 = smul.addr %s687, 8
        %s689 = scalar_lea.vmem %s15, %s688
        %p690 = scmp.lt.s32.totalorder %s46, 3
        %s691 = scalar_select %p690, %s46, 3
        %s692 = smul.addr %s691, 8
        %s693 = scalar_lea.vmem %s2, %s692
        %p694 = scmp.lt.s32.totalorder %s46, 3
        %s695 = scalar_select %p694, %s46, 3
        %s696 = smul.addr %s695, 8
        %s697 = scalar_lea.vmem %s3, %s696
        %p698 = scmp.lt.s32.totalorder %s46, 3
        %s699 = scalar_select %p698, %s46, 3
        %s700 = smul.addr %s699, 8
        %s701 = scalar_lea.vmem %s4, %s700
        %s702 = sld [smem:[#allocation6 + %s46]]
        %p703 = scmp.lt.s32.totalorder %s702, 3
        %s704 = scalar_select %p703, %s702, 3
        %s705 = smul.addr %s704, 8
        %s706 = scalar_lea.vmem %s9, %s705
        %s707 = sld [smem:[#allocation6 + %s46]]
        %s708 = sld [smem:[#allocation6 + %s46]]
        %p709 = scmp.lt.s32.totalorder %s708, 3
        %s710 = scalar_select %p709, %s708, 3
        %s711 = smul.addr %s710, 8
        %s712 = scalar_lea.vmem %s10, %s711
        %s713 = sld [smem:[#allocation6 + %s46]]
        %s714 = sld [smem:[#allocation6 + %s46]]
        %p715 = scmp.lt.s32.totalorder %s714, 3
        %s716 = scalar_select %p715, %s714, 3
        %s717 = smul.addr %s716, 4
        %s718 = scalar_lea.vmem %s11, %s717
        %s719 = sld [smem:[#allocation6 + %s46]]
        %s720 = sld [smem:[#allocation6 + %s46]]
        %s721 = sld [smem:[#allocation6 + %s46]]
        %p722 = scmp.lt.s32.totalorder %s721, 3
        %s723 = scalar_select %p722, %s721, 3
        %s724 = smul.addr %s723, 8
        %s725 = scalar_lea.vmem %s13, %s724
        %s726 = sld [smem:[#allocation6 + %s46]]
        %s727 = sld [smem:[#allocation6 + %s46]]
        %p728 = scmp.lt.s32.totalorder %s727, 3
        %s729 = scalar_select %p728, %s727, 3
        %s730 = scalar_lea.vmem %s14, %s729
        %s731 = sld [smem:[#allocation6 + %s46]]
        %p732 = scmp.lt.s32.totalorder %s46, 3
        %s733 = scalar_select %p732, %s46, 3
        %s734 = smul.addr %s733, 8
        %s735 = scalar_lea.vmem %s15, %s734
        %p736 = scmp.eq.s32.totalorder %s47, 0
        // Predicated region
        $region93: #{tpu_custom_call.1} parent=71 // pred_check
          %p737 = pneg %p736
        $region94: #{tpu_custom_call.1} parent=71 // pred_check_branch
          %739 = sbr.rel (%p737) target = $region96
        $region95: #{tpu_custom_call.1} parent=71 // pred_region
          %vm740 = vcmask 64512
          %741 = vst.msk [vmem:[#allocation3] sm:$0xff] %vm740, 0.0
          %vm742 = vcmask 7168
          %743 = vst.msk [vmem:[#allocation4] sm:$0xff] %vm742, 0.0
          %v744 = vld [vmem:[%s693] sm:$0xff]
          %v745 = vld [vmem:[%s712] sm:$0xff]
          %v746 = vld [vmem:[%s612] sm:$0x1]
          %v748 = vperm.slane %v746, 0
          %v751 = vsel %vm740, %v744, 0
          %753 = vmatpush.msra.mxu0 0.0
          %754 = vmatpush.msra.mxu0 0.0
          %755 = vmatpush.msra.mxu0 0.0
          %756 = vmatpush.msra.mxu0 0.0
          %757 = vmatpush.msra.mxu0 0.0
          %758 = vmatpush.msra.mxu0 0.0
          %759 = vmatpush.msra.mxu0 0.0
          %760 = vmatpush.msra.mxu0 0.0
          %761 = vmatpush.msra.mxu0 0.0
          %762 = vmatpush.msra.mxu0 0.0
          %763 = vmatpush.msra.mxu0 0.0
          %764 = vmatpush.msra.mxu0 0.0
          %765 = vmatpush.msra.mxu0 0.0
          %766 = vmatpush.msra.mxu0 0.0
          %767 = vmatpush.msra.mxu0 0.0
          %768 = vmatpush.msra.mxu0 %v745
          %769 = vmatmul.f32.gmra.mxu0 %v751
          %v770 = vpop.f32.mrf.mxu0
          %v771 = vadd.f32 %v748, %v770
          %772 = vdwg.mxu0
          %773 = vst.msk [vmem:[#allocation2] sm:$0xff] %vm740, %v771
        $region96: #{tpu_custom_call.1} parent=71 // pred_fallthru
          _
        %s774 = sadd.s32 %s46, %s47
        %s775 = sld [smem:[#allocation7 + %s774]]
        %p776 = scmp.ne.s32.totalorder %s775, 0
        // Predicated region
        $region97: #{tpu_custom_call.1} parent=71 // pred_check
          %p777 = pneg %p776
        $region98: #{tpu_custom_call.1} parent=71 // pred_check_branch
          %779 = sbr.rel (%p777) target = $region100
        $region99: #{tpu_custom_call.1} parent=71 // pred_region
          %v780 = vld [vmem:[%s697] sm:$0xff]
          %v781 = vld [vmem:[%s701] sm:$0xff]
          %v782 = vld [vmem:[#allocation10] sm:$0x7]
          %v783 = vld [vmem:[#allocation12] sm:$0x7]
          %v784 = vld [vmem:[#allocation13] sm:$0x1]
          %v785 = vperm.slane %v782, 0
          %787 = vset.pattern.permute.xlu0 0
          %788 = vperm.xlu0 %787, %v780
          %v789 = vpop.permute.xlu0 %788
          %v791 = vsub.f32 %v785, %v789
          %v792 = vperm.slane %v782, 1
          %793 = vset.pattern.permute.xlu0 1
          %794 = vperm.xlu0 %793, %v780
          %v795 = vpop.permute.xlu0 %794
          %v797 = vsub.f32 %v792, %v795
          %v798 = vperm.slane %v782, 2
          %799 = vset.pattern.permute.xlu0 2
          %800 = vperm.xlu0 %799, %v780
          %v801 = vpop.permute.xlu0 %800
          %v803 = vsub.f32 %v798, %v801
          %v804 = vmul.f32 %v791, %v791
          %v805 = vmul.f32 %v797, %v797
          %v806 = vadd.f32 %v804, %v805
          %v807 = vmul.f32 %v803, %v803
          %v808 = vadd.f32 %v806, %v807
          %vm809 = vcmp.lt.f32.partialorder %v808, 25.0
          %v810 = vsel %vm809, 1, 0
          %v811 = vcvt.s32.f32 %v810
          %v813 = vperm.slane %v784, 0
          %v815 = vmul.f32 %v811, %v813
          %v816 = vrsqrt.pop %v808
          %v817 = vmul.f32 %v816, %v808
          %v818 = vmul.f32 %v817, %v816
          %v819 = vmul.f32 0.5, %v818
          %v820 = vsub.f32 1.5, %v819
          %v821 = vmul.f32 %v816, %v820
          %v822 = vmul.f32 %v808, %v821
          %vm823 = vcmp.eq.f32.partialorder %v808, inf
          %v824 = vsel %vm823, %v808, %v822
          %vm825 = vcmp.eq.f32.partialorder %v808, 0.0
          %v826 = vand.u32 %v808, 2147483648
          %v827 = vsel %vm825, %v826, %v824
          %829 = vset.pattern.permute.xlu0 0
          %830 = vperm.xlu0 %829, %v781
          %v831 = vpop.permute.xlu0 %830
          %v833 = vmul.f32 %v831, %v791
          %834 = vset.pattern.permute.xlu0 1
          %835 = vperm.xlu0 %834, %v781
          %v836 = vpop.permute.xlu0 %835
          %v838 = vmul.f32 %v836, %v797
          %v839 = vadd.f32 %v833, %v838
          %840 = vset.pattern.permute.xlu0 2
          %841 = vperm.xlu0 %840, %v781
          %v842 = vpop.permute.xlu0 %841
          %v844 = vmul.f32 %v842, %v803
          %v845 = vadd.f32 %v839, %v844
          %v846 = vperm.slane %v783, 0
          %v847 = vmul.f32 %v846, %v791
          %v848 = vperm.slane %v783, 1
          %v849 = vmul.f32 %v848, %v797
          %v850 = vadd.f32 %v847, %v849
          %v851 = vperm.slane %v783, 2
          %v852 = vmul.f32 %v851, %v803
          %v853 = vadd.f32 %v850, %v852
          %v854 = vmul.f32 %v831, %v846
          %v855 = vmul.f32 %v836, %v848
          %v856 = vadd.f32 %v854, %v855
          %v857 = vmul.f32 %v842, %v851
          %v858 = vadd.f32 %v856, %v857
          %v859 = vmul.f32 %v845, %v845
          %v860 = vsub.f32 %v808, %v859
          %v861 = vmax.f32 %v860, 0.0
          %v862 = vrsqrt.pop %v861
          %v863 = vmul.f32 %v862, %v861
          %v864 = vmul.f32 %v863, %v862
          %v865 = vmul.f32 0.5, %v864
          %v866 = vsub.f32 1.5, %v865
          %v867 = vmul.f32 %v862, %v866
          %v868 = vmul.f32 %v861, %v867
          %vm869 = vcmp.eq.f32.partialorder %v861, inf
          %v870 = vsel %vm869, %v861, %v868
          %vm871 = vcmp.eq.f32.partialorder %v861, 0.0
          %v872 = vand.u32 %v861, 2147483648
          %v873 = vsel %vm871, %v872, %v870
          %v874 = vand.u32 2147483647, %v845
          %v875 = vmax.f32 %v874, %v873
          %v876 = vmin.f32 %v874, %v873
          %vm877 = vcmp.le.f32.partialorder %v875, 1e-30
          %v878 = vsel %vm877, 1.0, %v875
          %v879 = vrcp.pop %v878
          %v880 = vmul.f32 %v876, %v879
          %v881 = vmul.f32 %v880, %v880
          %v882 = vmul.f32 %v881, 0.0208351
          %v883 = vadd.f32 %v882, -0.085133
          %v884 = vmul.f32 %v881, %v883
          %v885 = vadd.f32 %v884, 0.180141
          %v886 = vmul.f32 %v881, %v885
          %v887 = vadd.f32 %v886, -0.3302995
          %v888 = vmul.f32 %v881, %v887
          %v889 = vadd.f32 %v888, 0.999866
          %v890 = vmul.f32 %v880, %v889
          %vm891 = vcmp.gt.f32.partialorder %v873, %v874
          %v892 = vsub.f32 1.5707964, %v890
          %v893 = vsel %vm891, %v892, %v890
          %vm894 = vcmp.lt.f32.partialorder %v845, 0.0
          %v895 = vsub.f32 3.1415927, %v893
          %v896 = vsel %vm894, %v895, %v893
          %v897 = vmul.f32 %v853, %v853
          %v898 = vsub.f32 %v808, %v897
          %v899 = vmax.f32 %v898, 0.0
          %v900 = vrsqrt.pop %v899
          %v901 = vmul.f32 %v900, %v899
          %v902 = vmul.f32 %v901, %v900
          %v903 = vmul.f32 0.5, %v902
          %v904 = vsub.f32 1.5, %v903
          %v905 = vmul.f32 %v900, %v904
          %v906 = vmul.f32 %v899, %v905
          %vm907 = vcmp.eq.f32.partialorder %v899, inf
          %v908 = vsel %vm907, %v899, %v906
          %vm909 = vcmp.eq.f32.partialorder %v899, 0.0
          %v910 = vand.u32 %v899, 2147483648
          %v911 = vsel %vm909, %v910, %v908
          %v912 = vand.u32 2147483647, %v853
          %v913 = vmax.f32 %v912, %v911
          %v914 = vmin.f32 %v912, %v911
          %vm915 = vcmp.le.f32.partialorder %v913, 1e-30
          %v916 = vsel %vm915, 1.0, %v913
          %v917 = vrcp.pop %v916
          %v918 = vmul.f32 %v914, %v917
          %v919 = vmul.f32 %v918, %v918
          %v920 = vmul.f32 %v919, 0.0208351
          %v921 = vadd.f32 %v920, -0.085133
          %v922 = vmul.f32 %v919, %v921
          %v923 = vadd.f32 %v922, 0.180141
          %v924 = vmul.f32 %v919, %v923
          %v925 = vadd.f32 %v924, -0.3302995
          %v926 = vmul.f32 %v919, %v925
          %v927 = vadd.f32 %v926, 0.999866
          %v928 = vmul.f32 %v918, %v927
          %vm929 = vcmp.gt.f32.partialorder %v911, %v912
          %v930 = vsub.f32 1.5707964, %v928
          %v931 = vsel %vm929, %v930, %v928
          %vm932 = vcmp.lt.f32.partialorder %v853, 0.0
          %v933 = vsub.f32 3.1415927, %v931
          %v934 = vsel %vm932, %v933, %v931
          %v935 = vmul.f32 %v858, %v858
          %v936 = vsub.f32 1.0, %v935
          %v937 = vmax.f32 %v936, 0.0
          %v938 = vrsqrt.pop %v937
          %v939 = vmul.f32 %v938, %v937
          %v940 = vmul.f32 %v939, %v938
          %v941 = vmul.f32 0.5, %v940
          %v942 = vsub.f32 1.5, %v941
          %v943 = vmul.f32 %v938, %v942
          %v944 = vmul.f32 %v937, %v943
          %vm945 = vcmp.eq.f32.partialorder %v937, inf
          %v946 = vsel %vm945, %v937, %v944
          %vm947 = vcmp.eq.f32.partialorder %v937, 0.0
          %v948 = vand.u32 %v937, 2147483648
          %v949 = vsel %vm947, %v948, %v946
          %v950 = vand.u32 2147483647, %v858
          %v951 = vmax.f32 %v950, %v949
          %v952 = vmin.f32 %v950, %v949
          %vm953 = vcmp.le.f32.partialorder %v951, 1e-30
          %v954 = vsel %vm953, 1.0, %v951
          %v955 = vrcp.pop %v954
          %v956 = vmul.f32 %v952, %v955
          %v957 = vmul.f32 %v956, %v956
          %v958 = vmul.f32 %v957, 0.0208351
          %v959 = vadd.f32 %v958, -0.085133
          %v960 = vmul.f32 %v957, %v959
          %v961 = vadd.f32 %v960, 0.180141
          %v962 = vmul.f32 %v957, %v961
          %v963 = vadd.f32 %v962, -0.3302995
          %v964 = vmul.f32 %v957, %v963
          %v965 = vadd.f32 %v964, 0.999866
          %v966 = vmul.f32 %v956, %v965
          %vm967 = vcmp.gt.f32.partialorder %v949, %v950
          %v968 = vsub.f32 1.5707964, %v966
          %v969 = vsel %vm967, %v968, %v966
          %vm970 = vcmp.lt.f32.partialorder %v858, 0.0
          %v971 = vsub.f32 3.1415927, %v969
          %v972 = vsel %vm970, %v971, %v969
          %v973 = vld [vmem:[%s706] sm:$0xff]
          %v974 = vld [vmem:[#allocation8] sm:$0xff]
          %vm975 = vcmask 64512
          %v977 = vsel %vm975, %v973, 0
          %979 = vmatpush.msra.mxu0 0.0
          %980 = vmatpush.msra.mxu0 0.0
          %981 = vmatpush.msra.mxu0 0.0
          %982 = vmatpush.msra.mxu0 0.0
          %983 = vmatpush.msra.mxu0 0.0
          %984 = vmatpush.msra.mxu0 0.0
          %985 = vmatpush.msra.mxu0 0.0
          %986 = vmatpush.msra.mxu0 0.0
          %987 = vmatpush.msra.mxu0 0.0
          %988 = vmatpush.msra.mxu0 0.0
          %989 = vmatpush.msra.mxu0 0.0
          %990 = vmatpush.msra.mxu0 0.0
          %991 = vmatpush.msra.mxu0 0.0
          %992 = vmatpush.msra.mxu0 0.0
          %993 = vmatpush.msra.mxu0 0.0
          %994 = vmatpush.msra.mxu0 %v974
          %995 = vmatmul.f32.gmra.mxu0 %v977
          %v996 = vpop.f32.mrf.mxu0
          %v997 = vadd.f32 0.0, %v996
          %998 = vdwg.mxu0
          %v999 = vld [vmem:[#allocation2] sm:$0xff]
          %v1000 = vld [vmem:[%s718] sm:$0xf]
          %v1001 = vperm.slane %v997, 0
          %1003 = vset.pattern.permute.xlu0 0
          %1004 = vperm.xlu0 %1003, %v999
          %v1005 = vpop.permute.xlu0 %1004
          %v1007 = vadd.f32 %v1001, %v1005
          %s1009 = vtos %v1000
          %v1010 = vstv %s1009
          %v1012 = vmul.f32 %v1010, %v827
          %v1013 = vadd.f32 %v1007, %v1012
          %v1014 = vrot.slane %v1000, 1
          %s1015 = vtos %v1014
          %v1016 = vstv %s1015
          %v1018 = vmul.f32 %v1016, %v896
          %v1019 = vadd.f32 %v1013, %v1018
          %v1020 = vrot.slane %v1000, 2
          %s1021 = vtos %v1020
          %v1022 = vstv %s1021
          %v1024 = vmul.f32 %v1022, %v934
          %v1025 = vadd.f32 %v1019, %v1024
          %v1026 = vrot.slane %v1000, 3
          %s1027 = vtos %v1026
          %v1028 = vstv %s1027
          %v1030 = vmul.f32 %v1028, %v972
          %v1031 = vadd.f32 %v1025, %v1030
          %v1032 = vmax.f32 %v1031, 0.0
          %v1033 = vmul.f32 %v1032, %v815
          %1034 = vadd.xlane.f32.xlu0 %v1033
          %v1035 = vpop.xlane.xlu0 %1034
          %v1036 = vperm.slane %v997, 1
          %1037 = vset.pattern.permute.xlu0 1
          %1038 = vperm.xlu0 %1037, %v999
          %v1039 = vpop.permute.xlu0 %1038
          %v1041 = vadd.f32 %v1036, %v1039
          %1042 = vrot.lane.b32.xlu0 %v1000, 127
          %v1043 = vpop.permute.xlu0 %1042
          %s1044 = vtos %v1043
          %v1045 = vstv %s1044
          %v1047 = vmul.f32 %v1045, %v827
          %v1048 = vadd.f32 %v1041, %v1047
          %1049 = vrot.lane.b32.xlu0 %v1014, 127
          %v1050 = vpop.permute.xlu0 %1049
          %s1051 = vtos %v1050
          %v1052 = vstv %s1051
          %v1054 = vmul.f32 %v1052, %v896
          %v1055 = vadd.f32 %v1048, %v1054
          %1056 = vrot.lane.b32.xlu0 %v1020, 127
          %v1057 = vpop.permute.xlu0 %1056
          %s1058 = vtos %v1057
          %v1059 = vstv %s1058
          %v1061 = vmul.f32 %v1059, %v934
          %v1062 = vadd.f32 %v1055, %v1061
          %1063 = vrot.lane.b32.xlu0 %v1026, 127
          %v1064 = vpop.permute.xlu0 %1063
          %s1065 = vtos %v1064
          %v1066 = vstv %s1065
          %v1068 = vmul.f32 %v1066, %v972
          %v1069 = vadd.f32 %v1062, %v1068
          %v1070 = vmax.f32 %v1069, 0.0
          %v1071 = vmul.f32 %v1070, %v815
          %1072 = vadd.xlane.f32.xlu0 %v1071
          %v1073 = vpop.xlane.xlu0 %1072
          %v1074 = vperm.slane %v997, 2
          %1075 = vset.pattern.permute.xlu0 2
          %1076 = vperm.xlu0 %1075, %v999
          %v1077 = vpop.permute.xlu0 %1076
          %v1079 = vadd.f32 %v1074, %v1077
          %1080 = vrot.lane.b32.xlu0 %v1000, 126
          %v1081 = vpop.permute.xlu0 %1080
          %s1082 = vtos %v1081
          %v1083 = vstv %s1082
          %v1085 = vmul.f32 %v1083, %v827
          %v1086 = vadd.f32 %v1079, %v1085
          %1087 = vrot.lane.b32.xlu0 %v1014, 126
          %v1088 = vpop.permute.xlu0 %1087
          %s1089 = vtos %v1088
          %v1090 = vstv %s1089
          %v1092 = vmul.f32 %v1090, %v896
          %v1093 = vadd.f32 %v1086, %v1092
          %1094 = vrot.lane.b32.xlu0 %v1020, 126
          %v1095 = vpop.permute.xlu0 %1094
          %s1096 = vtos %v1095
          %v1097 = vstv %s1096
          %v1099 = vmul.f32 %v1097, %v934
          %v1100 = vadd.f32 %v1093, %v1099
          %1101 = vrot.lane.b32.xlu0 %v1026, 126
          %v1102 = vpop.permute.xlu0 %1101
          %s1103 = vtos %v1102
          %v1104 = vstv %s1103
          %v1106 = vmul.f32 %v1104, %v972
          %v1107 = vadd.f32 %v1100, %v1106
          %v1108 = vmax.f32 %v1107, 0.0
          %v1109 = vmul.f32 %v1108, %v815
          %1110 = vadd.xlane.f32.xlu0 %v1109
          %v1111 = vpop.xlane.xlu0 %1110
          %v1112 = vperm.slane %v997, 3
          %1113 = vset.pattern.permute.xlu0 3
          %1114 = vperm.xlu0 %1113, %v999
          %v1115 = vpop.permute.xlu0 %1114
          %v1117 = vadd.f32 %v1112, %v1115
          %1118 = vrot.lane.b32.xlu0 %v1000, 125
          %v1119 = vpop.permute.xlu0 %1118
          %s1120 = vtos %v1119
          %v1121 = vstv %s1120
          %v1123 = vmul.f32 %v1121, %v827
          %v1124 = vadd.f32 %v1117, %v1123
          %1125 = vrot.lane.b32.xlu0 %v1014, 125
          %v1126 = vpop.permute.xlu0 %1125
          %s1127 = vtos %v1126
          %v1128 = vstv %s1127
          %v1130 = vmul.f32 %v1128, %v896
          %v1131 = vadd.f32 %v1124, %v1130
          %1132 = vrot.lane.b32.xlu0 %v1020, 125
          %v1133 = vpop.permute.xlu0 %1132
          %s1134 = vtos %v1133
          %v1135 = vstv %s1134
          %v1137 = vmul.f32 %v1135, %v934
          %v1138 = vadd.f32 %v1131, %v1137
          %1139 = vrot.lane.b32.xlu0 %v1026, 125
          %v1140 = vpop.permute.xlu0 %1139
          %s1141 = vtos %v1140
          %v1142 = vstv %s1141
          %v1144 = vmul.f32 %v1142, %v972
          %v1145 = vadd.f32 %v1138, %v1144
          %v1146 = vmax.f32 %v1145, 0.0
          %v1147 = vmul.f32 %v1146, %v815
          %1148 = vadd.xlane.f32.xlu0 %v1147
          %v1149 = vpop.xlane.xlu0 %1148
          %v1150 = vperm.slane %v997, 4
          %1151 = vset.pattern.permute.xlu0 4
          %1152 = vperm.xlu0 %1151, %v999
          %v1153 = vpop.permute.xlu0 %1152
          %v1155 = vadd.f32 %v1150, %v1153
          %1156 = vrot.lane.b32.xlu0 %v1000, 124
          %v1157 = vpop.permute.xlu0 %1156
          %s1158 = vtos %v1157
          %v1159 = vstv %s1158
          %v1161 = vmul.f32 %v1159, %v827
          %v1162 = vadd.f32 %v1155, %v1161
          %1163 = vrot.lane.b32.xlu0 %v1014, 124
          %v1164 = vpop.permute.xlu0 %1163
          %s1165 = vtos %v1164
          %v1166 = vstv %s1165
          %v1168 = vmul.f32 %v1166, %v896
          %v1169 = vadd.f32 %v1162, %v1168
          %1170 = vrot.lane.b32.xlu0 %v1020, 124
          %v1171 = vpop.permute.xlu0 %1170
          %s1172 = vtos %v1171
          %v1173 = vstv %s1172
          %v1175 = vmul.f32 %v1173, %v934
          %v1176 = vadd.f32 %v1169, %v1175
          %1177 = vrot.lane.b32.xlu0 %v1026, 124
          %v1178 = vpop.permute.xlu0 %1177
          %s1179 = vtos %v1178
          %v1180 = vstv %s1179
          %v1182 = vmul.f32 %v1180, %v972
          %v1183 = vadd.f32 %v1176, %v1182
          %v1184 = vmax.f32 %v1183, 0.0
          %v1185 = vmul.f32 %v1184, %v815
          %1186 = vadd.xlane.f32.xlu0 %v1185
          %v1187 = vpop.xlane.xlu0 %1186
          %v1188 = vperm.slane %v997, 5
          %1189 = vset.pattern.permute.xlu0 5
          %1190 = vperm.xlu0 %1189, %v999
          %v1191 = vpop.permute.xlu0 %1190
          %v1193 = vadd.f32 %v1188, %v1191
          %1194 = vrot.lane.b32.xlu0 %v1000, 123
          %v1195 = vpop.permute.xlu0 %1194
          %s1196 = vtos %v1195
          %v1197 = vstv %s1196
          %v1199 = vmul.f32 %v1197, %v827
          %v1200 = vadd.f32 %v1193, %v1199
          %1201 = vrot.lane.b32.xlu0 %v1014, 123
          %v1202 = vpop.permute.xlu0 %1201
          %s1203 = vtos %v1202
          %v1204 = vstv %s1203
          %v1206 = vmul.f32 %v1204, %v896
          %v1207 = vadd.f32 %v1200, %v1206
          %1208 = vrot.lane.b32.xlu0 %v1020, 123
          %v1209 = vpop.permute.xlu0 %1208
          %s1210 = vtos %v1209
          %v1211 = vstv %s1210
          %v1213 = vmul.f32 %v1211, %v934
          %v1214 = vadd.f32 %v1207, %v1213
          %1215 = vrot.lane.b32.xlu0 %v1026, 123
          %v1216 = vpop.permute.xlu0 %1215
          %s1217 = vtos %v1216
          %v1218 = vstv %s1217
          %v1220 = vmul.f32 %v1218, %v972
          %v1221 = vadd.f32 %v1214, %v1220
          %v1222 = vmax.f32 %v1221, 0.0
          %v1223 = vmul.f32 %v1222, %v815
          %1224 = vadd.xlane.f32.xlu0 %v1223
          %v1225 = vpop.xlane.xlu0 %1224
          %v1226 = vperm.slane %v997, 6
          %1227 = vset.pattern.permute.xlu0 6
          %1228 = vperm.xlu0 %1227, %v999
          %v1229 = vpop.permute.xlu0 %1228
          %v1231 = vadd.f32 %v1226, %v1229
          %1232 = vrot.lane.b32.xlu0 %v1000, 122
          %v1233 = vpop.permute.xlu0 %1232
          %s1234 = vtos %v1233
          %v1235 = vstv %s1234
          %v1237 = vmul.f32 %v1235, %v827
          %v1238 = vadd.f32 %v1231, %v1237
          %1239 = vrot.lane.b32.xlu0 %v1014, 122
          %v1240 = vpop.permute.xlu0 %1239
          %s1241 = vtos %v1240
          %v1242 = vstv %s1241
          %v1244 = vmul.f32 %v1242, %v896
          %v1245 = vadd.f32 %v1238, %v1244
          %1246 = vrot.lane.b32.xlu0 %v1020, 122
          %v1247 = vpop.permute.xlu0 %1246
          %s1248 = vtos %v1247
          %v1249 = vstv %s1248
          %v1251 = vmul.f32 %v1249, %v934
          %v1252 = vadd.f32 %v1245, %v1251
          %1253 = vrot.lane.b32.xlu0 %v1026, 122
          %v1254 = vpop.permute.xlu0 %1253
          %s1255 = vtos %v1254
          %v1256 = vstv %s1255
          %v1258 = vmul.f32 %v1256, %v972
          %v1259 = vadd.f32 %v1252, %v1258
          %v1260 = vmax.f32 %v1259, 0.0
          %v1261 = vmul.f32 %v1260, %v815
          %1262 = vadd.xlane.f32.xlu0 %v1261
          %v1263 = vpop.xlane.xlu0 %1262
          %v1264 = vperm.slane %v997, 7
          %1265 = vset.pattern.permute.xlu0 7
          %1266 = vperm.xlu0 %1265, %v999
          %v1267 = vpop.permute.xlu0 %1266
          %v1269 = vadd.f32 %v1264, %v1267
          %1270 = vrot.lane.b32.xlu0 %v1000, 121
          %v1271 = vpop.permute.xlu0 %1270
          %s1272 = vtos %v1271
          %v1273 = vstv %s1272
          %v1275 = vmul.f32 %v1273, %v827
          %v1276 = vadd.f32 %v1269, %v1275
          %1277 = vrot.lane.b32.xlu0 %v1014, 121
          %v1278 = vpop.permute.xlu0 %1277
          %s1279 = vtos %v1278
          %v1280 = vstv %s1279
          %v1282 = vmul.f32 %v1280, %v896
          %v1283 = vadd.f32 %v1276, %v1282
          %1284 = vrot.lane.b32.xlu0 %v1020, 121
          %v1285 = vpop.permute.xlu0 %1284
          %s1286 = vtos %v1285
          %v1287 = vstv %s1286
          %v1289 = vmul.f32 %v1287, %v934
          %v1290 = vadd.f32 %v1283, %v1289
          %1291 = vrot.lane.b32.xlu0 %v1026, 121
          %v1292 = vpop.permute.xlu0 %1291
          %s1293 = vtos %v1292
          %v1294 = vstv %s1293
          %v1296 = vmul.f32 %v1294, %v972
          %v1297 = vadd.f32 %v1290, %v1296
          %v1298 = vmax.f32 %v1297, 0.0
          %v1299 = vmul.f32 %v1298, %v815
          %1300 = vadd.xlane.f32.xlu0 %v1299
          %v1301 = vpop.xlane.xlu0 %1300
          %v1302 = vld [vmem:[#allocation3] sm:$0xff]
          %vm1303 = vcmask 7168
          %v1304 = vsel %vm1303, %v1035, %v1073
          %vm1305 = vcmask 15360
          %v1306 = vsel %vm1305, %v1304, %v1111
          %vm1307 = vcmask 23552
          %v1308 = vsel %vm1307, %v1306, %v1149
          %vm1309 = vcmask 31744
          %v1310 = vsel %vm1309, %v1308, %v1187
          %vm1311 = vcmask 39936
          %v1312 = vsel %vm1311, %v1310, %v1225
          %vm1313 = vcmask 48128
          %v1314 = vsel %vm1313, %v1312, %v1263
          %vm1315 = vcmask 56320
          %v1316 = vsel %vm1315, %v1314, %v1301
          %v1317 = vadd.f32 %v1302, %v1316
          %1318 = vst.msk [vmem:[#allocation3] sm:$0xff] %vm975, %v1317
          %v1319 = vld [vmem:[#allocation4] sm:$0xff]
          %1320 = vadd.xlane.f32.xlu0 %v815
          %v1321 = vpop.xlane.xlu0 %1320
          %v1322 = vadd.f32 %v1319, %v1321
          %1323 = vst.msk [vmem:[#allocation4] sm:$0xff] %vm1303, %v1322
        $region100: #{tpu_custom_call.1} parent=71 // pred_fallthru
          _
        // Predicated region
        $region101: #{tpu_custom_call.1} parent=71 // pred_check
          %p1324 = pneg %p736
        $region102: #{tpu_custom_call.1} parent=71 // pred_check_branch
          %1326 = sbr.rel (%p1324) target = $region104
        $region103: #{tpu_custom_call.1} parent=71 // pred_region
          %v1327 = vld [vmem:[#allocation3] sm:$0xff]
          %v1328 = vld [vmem:[%s725] sm:$0xff]
          %v1329 = vld [vmem:[#allocation4] sm:$0xff]
          %v1330 = vld [vmem:[%s730] sm:$0x1]
          %1332 = vset.pattern.permute.xlu0 0
          %1333 = vperm.xlu0 %1332, %v1329
          %v1334 = vpop.permute.xlu0 %1333
          %v1337 = vperm.slane %v1330, 0
          %v1339 = vmul.f32 %v1334, %v1337
          %vm1340 = vcmask 64512
          %v1342 = vsel %vm1340, %v1327, 0
          %1344 = vmatpush.msra.mxu0 0.0
          %1345 = vmatpush.msra.mxu0 0.0
          %1346 = vmatpush.msra.mxu0 0.0
          %1347 = vmatpush.msra.mxu0 0.0
          %1348 = vmatpush.msra.mxu0 0.0
          %1349 = vmatpush.msra.mxu0 0.0
          %1350 = vmatpush.msra.mxu0 0.0
          %1351 = vmatpush.msra.mxu0 0.0
          %1352 = vmatpush.msra.mxu0 0.0
          %1353 = vmatpush.msra.mxu0 0.0
          %1354 = vmatpush.msra.mxu0 0.0
          %1355 = vmatpush.msra.mxu0 0.0
          %1356 = vmatpush.msra.mxu0 0.0
          %1357 = vmatpush.msra.mxu0 0.0
          %1358 = vmatpush.msra.mxu0 0.0
          %1359 = vmatpush.msra.mxu0 %v1328
          %1360 = vmatmul.f32.gmra.mxu0 %v1342
          %v1361 = vpop.f32.mrf.mxu0
          %v1362 = vadd.f32 %v1339, %v1361
          %1363 = vdwg.mxu0
          %v1364 = vmax.f32 %v1362, 0.0
          %1365 = vst.msk [vmem:[%s735] sm:$0xff] %vm1340, %v1364
          %1367 = vrot.lane.b32.xlu0 %v1362, 8
          %v1368 = vpop.permute.xlu0 %1367
          %vm1370 = vcmask 130112
          %1371 = vst.msk [vmem:[%s735] sm:$0xff] %vm1370, %v1368
        $region104: #{tpu_custom_call.1} parent=71 // pred_fallthru
          _
        %p1372 = scmp.lt.s32.totalorder %s46, 3
        %s1373 = scalar_select %p1372, %s46, 3
        %s1374 = smul.addr %s1373, 8
        %s1375 = scalar_lea.vmem %s15, %s1374
        // Predicated region
        $region105: #{tpu_custom_call.1} parent=71 // pred_check
          %p1376 = pneg %p422
        $region106: #{tpu_custom_call.1} parent=71 // pred_check_branch
          %1378 = sbr.rel (%p1376) target = $region108
        $region107: #{tpu_custom_call.1} parent=71 // pred_region
          _
        $region108: #{tpu_custom_call.1} parent=71 // pred_fallthru
          _
      $region72: #{tpu_custom_call.1} parent=5 // pred_fallthru
        _
      %p1379 = scmp.le.s32.totalorder 2, %s37
      // Predicated region
      $region109: #{tpu_custom_call.1} parent=5 // pred_check
        %p1380 = pneg %p1379
      $region110: #{tpu_custom_call.1} parent=5 // pred_check_branch
        %1382 = sbr.rel (%p1380) target = $region112
      $region111: #{tpu_custom_call.1} parent=5 // pred_region
        %s1383 = ssub.s32 %s37, 2
        // Predicated region
        $region113: #{tpu_custom_call.1} parent=111 // pred_check
          %p1384 = pneg %p428
        $region114: #{tpu_custom_call.1} parent=111 // pred_check_branch
          %1386 = sbr.rel (%p1384) target = $region116
        $region115: #{tpu_custom_call.1} parent=111 // pred_region
          %p1387 = scmp.lt.s32.totalorder %s48, 3
          %s1388 = scalar_select %p1387, %s48, 3
          %s1389 = smul.addr %s1388, 8
          %s1390 = scalar_lea.vmem %s15, %s1389
        $region116: #{tpu_custom_call.1} parent=111 // pred_fallthru
          _
      $region112: #{tpu_custom_call.1} parent=5 // pred_fallthru
        _
    $region6: #{tpu_custom_call.1} parent=1 // loop_footer
      %s41 = sadd.s32 1, %s37
    $region7: #{tpu_custom_call.1} parent=1 // loop_footer_branch
      %36 = sbr.rel target = $region3
    $region8: #{tpu_custom_call.1} parent=1 // loop_exit
      _
    %1391 = vsyncpa [#allocation9], 1
    %s1392 = scalar_lea.sflag [#allocation9], 1
    %1393 = vsyncpa %s1392, 1
    %1394 = vsyncpa [#allocation11], 1
    %1395 = vsyncpa [#allocation14], 1

</llo_original>
